<compile_context>
chip_gen: v6e
topology: v6e:2x2x1
jax: 0.10.0
libtpu: 0.0.40
codegen_flags: <defaults>
</compile_context>

<pallas_src>
import functools

import jax
import jax.numpy as jnp
from jax.experimental import pallas as pl
from jax.experimental.pallas import tpu as pltpu


def _dequant_dtype_for_device():
    """bf16 dequant math on chips with bf16 VALUs (v6e/v7x); f32 on v5e and older."""
    try:
        kind = jax.devices()[0].device_kind.lower()
    except Exception:
        return jnp.float32
    if not kind.startswith("tpu"):
        return jnp.float32
    for tag in ("v2", "v3", "v4", "v5"):
        if tag in kind:
            return jnp.float32
    return jnp.bfloat16


def _round_up(x, m):
    return ((x + m - 1) // m) * m


def _woq_silu_mul_kernel(inp_ref, qw_ref, s_ref, zs_ref, b_ref, mul_ref, out_ref,
                         x16_s, xg_s, w_s,
                         *, k8, group_size, rc, dq_dtype):
    """One (M-tile, N-tile) grid step.

    Packed layout: nibble p of qw[r, n] is the uint4 code for k = p*k8 + r.

    Per step:
      * j == 0 only: cache the bf16 activation block and its per-group row-sums,
      * dequantize the full [K, tn] weight slab into a VMEM bf16 scratch
        (each packed int32 word read exactly once; dequant = nibble * scale only),
      * ONE full-K MXU dot + a tiny f32 zero-point correction dot:
            lin = x @ (q*s)  -  xg @ (z*s)  + bias
      * SiLU (f32) and elementwise multiply.
    """
    K = 8 * k8
    tm, tn = out_ref.shape
    n_groups = s_ref.shape[0]
    gpp = k8 // group_size            # groups per nibble plane
    n_chunks = k8 // rc               # packed-row chunks per plane
    gpc = rc // group_size            # groups per chunk (rc is a multiple of gs)

    j = pl.program_id(1)

    # ---- once per M tile: bf16 activation cache + per-group activation sums ----
    @pl.when(j == 0)
    def _():
        x16_s[...] = inp_ref[...].astype(jnp.bfloat16)
        # group-selector matrix sel[k, g] = 1.0 iff k // group_size == g
        k_iota = jax.lax.broadcasted_iota(jnp.int32, (K, n_groups), 0)
        g_iota = jax.lax.broadcasted_iota(jnp.int32, (K, n_groups), 1)
        d = k_iota - g_iota * group_size
        sel = jnp.where((d >= 0) & (d < group_size), 1.0, 0.0).astype(jnp.bfloat16)
        xg_s[...] = jnp.dot(x16_s[...], sel, preferred_element_type=jnp.float32)

    # ---- dequantize the [K, tn] slab into VMEM; each packed word read once ----
    for c in range(n_chunks):
        qw_c = qw_ref[c * rc:(c + 1) * rc, :]                       # [rc, tn] int32
        for p in range(8):
            nib = ((qw_c >> (4 * p)) & 0xF).astype(dq_dtype)        # [rc, tn]
            g0 = p * gpp + c * gpc
            s_c = s_ref[g0:g0 + gpc, :]                             # [gpc, tn]
            if gpc == 1:
                w = nib * s_c                                       # [rc,tn]*[1,tn]
            else:
                w = (nib.reshape(gpc, group_size, tn)
                     * s_c[:, None, :]).reshape(rc, tn)
            r0 = p * k8 + c * rc
            w_s[r0:r0 + rc, :] = w.astype(jnp.bfloat16)

    # ---- one full-K dot, f32 zero-point correction dot, bias + SiLU + mul ----
    main = jnp.dot(x16_s[...], w_s[...], preferred_element_type=jnp.float32)
    corr = jnp.dot(xg_s[...], zs_ref[...], preferred_element_type=jnp.float32)
    lin = main - corr + b_ref[...]
    act = lin * jax.nn.sigmoid(lin)                                 # SiLU, f32
    out_ref[...] = (act * mul_ref[...]).astype(out_ref.dtype)


def woq_linear_silu_mul(inp, qweight, woq_scales, woq_qzeros, woq_bias, mul,
                        group_size, *, tn=256, tm_max=256, dequant_dtype=None):
    """out = silu(inp @ dequant(qweight, scales, qzeros) + bias) * mul."""
    M, K = inp.shape
    K8, N = qweight.shape
    assert K8 * 8 == K, "qweight must pack 8 int4 codes per int32 along K"
    assert K8 % group_size == 0, "group_size must divide K//8 (groups stay per-plane)"
    n_groups = K // group_size
    assert woq_scales.shape == (n_groups, N)
    assert woq_qzeros.shape == (n_groups, N)
    assert woq_bias.shape == (N,)
    assert mul.shape == (M, N)
    assert N % 128 == 0

    if dequant_dtype is None:
        dequant_dtype = _dequant_dtype_for_device()

    # ---- tile sizes ----
    tn = min(tn, N)
    while N % tn != 0:
        tn -= 128
    assert tn >= 128

    tm = min(tm_max, _round_up(M, 8))     # cap for v7x VMEM (64 MiB)
    M_pad = _round_up(M, tm)              # pad M; never promote tm to full M

    # Packed-row chunk for the unpack loop: a multiple of group_size dividing K8,
    # grown a little to bound unroll while keeping vreg pressure moderate.
    rc = group_size
    while (K8 // rc) > 8 and K8 % (2 * rc) == 0 and rc < 128:
        rc *= 2

    # ---- small precomputed operands ----
    zs = woq_qzeros.astype(jnp.float32) * woq_scales          # zero*scale (f32)
    scales_dq = woq_scales.astype(dequant_dtype)
    bias2d = woq_bias.reshape(1, N).astype(jnp.float32)

    inp_p = inp if M_pad == M else jnp.pad(inp, ((0, M_pad - M), (0, 0)))
    mul_p = mul if M_pad == M else jnp.pad(mul, ((0, M_pad - M), (0, 0)))

    # ---- explicit scoped-VMEM budget (double-buffered blocks + scratch) ----
    dq_bytes = jnp.dtype(dequant_dtype).itemsize
    step_bytes = (2 * tm * K * 4                         # activation block
                  + 2 * K8 * tn * 4                      # packed int4 block
                  + 2 * n_groups * tn * (dq_bytes + 4)   # scales + zero*scale
                  + 2 * tn * 4                           # bias
                  + 4 * tm * tn * 4                      # mul + out blocks
                  + tm * K * 2 + tm * n_groups * 4 + K * tn * 2)   # scratch
    vmem_limit = int(max(32 << 20, min(64 << 20, (step_bytes * 3) // 2)))

    kernel = functools.partial(_woq_silu_mul_kernel, k8=K8, group_size=group_size,
                               rc=rc, dq_dtype=dequant_dtype)

    out = pl.pallas_call(
        kernel,
        out_shape=jax.ShapeDtypeStruct((M_pad, N), jnp.float32),
        grid_spec=pltpu.PrefetchScalarGridSpec(
            num_scalar_prefetch=0,
            # N is the fast axis; the activation block index is constant over it so
            # the [tm, K] block is DMA'd / bf16-cast / group-summed once per M tile.
            # Scratch state is carried over N -> N axis must be "arbitrary".
            grid=(M_pad // tm, N // tn),
            in_specs=[
                pl.BlockSpec((tm, K), lambda mi, j: (mi, 0)),        # activations
                pl.BlockSpec((K8, tn), lambda mi, j: (0, j)),        # packed int4
                pl.BlockSpec((n_groups, tn), lambda mi, j: (0, j)),  # scales
                pl.BlockSpec((n_groups, tn), lambda mi, j: (0, j)),  # zero*scale
                pl.BlockSpec((1, tn), lambda mi, j: (0, j)),         # bias
                pl.BlockSpec((tm, tn), lambda mi, j: (mi, j)),       # mul operand
            ],
            out_specs=pl.BlockSpec((tm, tn), lambda mi, j: (mi, j)),
            scratch_shapes=[
                pltpu.VMEM((tm, K), jnp.bfloat16),         # bf16 activation cache
                pltpu.VMEM((tm, n_groups), jnp.float32),   # per-group activation sums
                pltpu.VMEM((K, tn), jnp.bfloat16),         # dequantized weight slab
            ],
        ),
        compiler_params=pltpu.CompilerParams(
            dimension_semantics=("parallel", "arbitrary"),
            vmem_limit_bytes=vmem_limit),
    )(inp_p, qweight, scales_dq, zs, bias2d, mul_p)

    return out if M_pad == M else out[:M]


if __name__ == "__main__":
    key = jax.random.PRNGKey(0)
    kx, kw, ks, kz, kb, km = jax.random.split(key, 6)

    M, K, N = 8, 512, 512
    group_size = 32
    K8 = K // 8
    n_groups = K // group_size

    inp = jax.random.normal(kx, (M, K), dtype=jnp.float32)
    wq_codes = jax.random.randint(kw, (K, N), 0, 16, dtype=jnp.int32)   # raw int4 codes
    woq_scales = jax.random.uniform(ks, (n_groups, N), jnp.float32, 0.01, 0.03)
    woq_qzeros = jax.random.randint(kz, (n_groups, N), 0, 16, dtype=jnp.int32)
    woq_bias = 0.1 * jax.random.normal(kb, (N,), dtype=jnp.float32)
    mul = jax.random.normal(km, (M, N), dtype=jnp.float32)

    # Planar int4 packing: nibble p of qweight[r, n] <- code for k = p*K8 + r.
    planes = wq_codes.reshape(8, K8, N).astype(jnp.uint32)
    packed = jnp.zeros((K8, N), jnp.uint32)
    for p in range(8):
        packed = packed | (planes[p] << jnp.uint32(4 * p))
    qweight = jax.lax.bitcast_convert_type(packed, jnp.int32)

    dq = _dequant_dtype_for_device()
    out = woq_linear_silu_mul(inp, qweight, woq_scales, woq_qzeros, woq_bias,
                              mul, group_size, dequant_dtype=dq)
    out = jax.block_until_ready(out)

    # Reference A: mirrors the kernel's arithmetic (bf16 MXU feeds, zero point folded
    # into a group-sum correction matmul) -> tight-ish tolerance; checks packing,
    # group indexing, bias, SiLU and mul structurally.
    g_idx = jnp.arange(K) // group_size
    s_exp = woq_scales[g_idx]                                          # [K, N]
    x16 = inp.astype(jnp.bfloat16)
    w16 = (wq_codes.astype(dq) * s_exp.astype(dq)).astype(jnp.bfloat16)
    main_r = jnp.dot(x16, w16, preferred_element_type=jnp.float32)
    selA = (g_idx[:, None] == jnp.arange(n_groups)[None, :]).astype(jnp.bfloat16)
    xg_r = jnp.dot(x16, selA, preferred_element_type=jnp.float32)
    zs_r = woq_qzeros.astype(jnp.float32) * woq_scales
    corr_r = jnp.dot(xg_r, zs_r, preferred_element_type=jnp.float32,
                     precision=jax.lax.Precision.HIGHEST)
    linA = main_r - corr_r + woq_bias[None, :]
    refA = (linA * jax.nn.sigmoid(linA)) * mul

    # Reference B: pure-f32 module semantics -> loose tolerance (kernel matmul is bf16).
    z_exp = woq_qzeros[g_idx].astype(jnp.float32)
    w_deq = (wq_codes.astype(jnp.float32) - z_exp) * s_exp
    lin32 = jnp.dot(inp, w_deq, precision=jax.lax.Precision.HIGHEST) + woq_bias[None, :]
    refB = (lin32 * jax.nn.sigmoid(lin32)) * mul

    errA = float(jnp.max(jnp.abs(out - refA)))
    errB = float(jnp.max(jnp.abs(out - refB)))
    assert jnp.allclose(out, refA, atol=2e-2, rtol=2e-2), f"kernel-path ref err {errA}"
    assert jnp.allclose(out, refB, atol=1.5e-1, rtol=5e-2), f"f32 ref err {errB}"

    print("KERNEL_OK")
</pallas_src>

<mosaic_0001>
module attributes {stable_mosaic.version = 11 : i64} {
  func.func @_woq_silu_mul_kernel(%arg0: i32, %arg1: i32, %arg2: memref<8x512xf32, #tpu.memory_space<vmem>>, %arg3: memref<64x256xi32, #tpu.memory_space<vmem>>, %arg4: memref<16x256xf32, #tpu.memory_space<vmem>>, %arg5: memref<16x256xf32, #tpu.memory_space<vmem>>, %arg6: memref<1x256xf32, #tpu.memory_space<vmem>>, %arg7: memref<8x256xf32, #tpu.memory_space<vmem>>, %arg8: memref<8x256xf32, #tpu.memory_space<vmem>>, %arg9: memref<8x512xbf16, #tpu.memory_space<vmem>>, %arg10: memref<8x16xf32, #tpu.memory_space<vmem>>, %arg11: memref<512x256xbf16, #tpu.memory_space<vmem>>) attributes {dimension_semantics = [#tpu.dimension_semantics<parallel>, #tpu.dimension_semantics<arbitrary>], iteration_bounds = array<i64: 1, 2>, scalar_prefetch = 0 : i64, scratch_operands = 3 : i64, tpu.core_type = #tpu.core_type<tc>, window_params = [{transform_indices = @transform_0, window_bounds = array<i64: 8, 512>}, {transform_indices = @transform_1, window_bounds = array<i64: 64, 256>}, {transform_indices = @transform_2, window_bounds = array<i64: 16, 256>}, {transform_indices = @transform_3, window_bounds = array<i64: 16, 256>}, {transform_indices = @transform_4, window_bounds = array<i64: 1, 256>}, {transform_indices = @transform_5, window_bounds = array<i64: 8, 256>}, {transform_indices = @transform_6, window_bounds = array<i64: 8, 256>}]} {
    %c0_i32 = arith.constant 0 : i32
    %0 = arith.cmpi eq, %arg1, %c0_i32 : i32
    %1 = arith.extui %0 : i1 to i32
    %c0_i32_0 = arith.constant 0 : i32
    %2 = arith.cmpi ne, %1, %c0_i32_0 : i32
    scf.if %2 {
      %c0_78 = arith.constant 0 : index
      %c0_79 = arith.constant 0 : index
      %184 = vector.load %arg2[%c0_78, %c0_79] : memref<8x512xf32, #tpu.memory_space<vmem>>, vector<8x512xf32>
      %185 = arith.truncf %184 : vector<8x512xf32> to vector<8x512xbf16>
      %c0_80 = arith.constant 0 : index
      %c0_81 = arith.constant 0 : index
      %186 = vector.load %arg9[%c0_80, %c0_81] : memref<8x512xbf16, #tpu.memory_space<vmem>>, vector<8x512xbf16>
      tpu.vector_store %arg9[%c0_80, %c0_81], %185 {strides = array<i32>} : memref<8x512xbf16, #tpu.memory_space<vmem>>, vector<8x512xbf16>,
      %187 = tpu.iota {dimensions = array<i32: 0>} : vector<512x16xi32>
      %188 = tpu.iota {dimensions = array<i32: 1>} : vector<512x16xi32>
      %c32_i32 = arith.constant 32 : i32
      %189 = vector.broadcast %c32_i32 : i32 to vector<512x16xi32>
      %190 = arith.muli %188, %189 : vector<512x16xi32>
      %191 = arith.subi %187, %190 : vector<512x16xi32>
      %c0_i32_82 = arith.constant 0 : i32
      %192 = vector.broadcast %c0_i32_82 : i32 to vector<512x16xi32>
      %193 = arith.cmpi sge, %191, %192 : vector<512x16xi32>
      %c32_i32_83 = arith.constant 32 : i32
      %194 = vector.broadcast %c32_i32_83 : i32 to vector<512x16xi32>
      %195 = arith.cmpi slt, %191, %194 : vector<512x16xi32>
      %196 = arith.andi %193, %195 : vector<512x16xi1>
      %cst_84 = arith.constant 1.000000e+00 : f32
      %cst_85 = arith.constant 0.000000e+00 : f32
      %197 = vector.broadcast %cst_84 : f32 to vector<512x16xf32>
      %198 = vector.broadcast %cst_85 : f32 to vector<512x16xf32>
      %199 = arith.select %196, %197, %198 : vector<512x16xi1>, vector<512x16xf32>
      %200 = arith.truncf %199 : vector<512x16xf32> to vector<512x16xbf16>
      %c0_86 = arith.constant 0 : index
      %c0_87 = arith.constant 0 : index
      %201 = vector.load %arg9[%c0_86, %c0_87] : memref<8x512xbf16, #tpu.memory_space<vmem>>, vector<8x512xbf16>
      %cst_88 = arith.constant dense<0.000000e+00> : vector<8x16xf32>
      %202 = tpu.matmul %201, %200, %cst_88 {dimension_numbers = #tpu.dot_dimension_numbers<[1], [0], [0], [1], [0, 0, 1, 1], [], []>} : vector<8x512xbf16>, vector<512x16xbf16>, vector<8x16xf32> -> vector<8x16xf32>
      %c0_89 = arith.constant 0 : index
      %c0_90 = arith.constant 0 : index
      %203 = vector.load %arg10[%c0_89, %c0_90] : memref<8x16xf32, #tpu.memory_space<vmem>>, vector<8x16xf32>
      tpu.vector_store %arg10[%c0_89, %c0_90], %202 {strides = array<i32>} : memref<8x16xf32, #tpu.memory_space<vmem>>, vector<8x16xf32>,
    } else {
    }
    %c0 = arith.constant 0 : index
    %c0_1 = arith.constant 0 : index
    %3 = vector.load %arg3[%c0, %c0_1] : memref<64x256xi32, #tpu.memory_space<vmem>>, vector<32x256xi32>
    %c0_i32_2 = arith.constant 0 : i32
    %4 = vector.broadcast %c0_i32_2 : i32 to vector<32x256xi32>
    %5 = arith.shrsi %3, %4 : vector<32x256xi32>
    %c15_i32 = arith.constant 15 : i32
    %6 = vector.broadcast %c15_i32 : i32 to vector<32x256xi32>
    %7 = arith.andi %5, %6 : vector<32x256xi32>
    %8 = arith.sitofp %7 : vector<32x256xi32> to vector<32x256xf32>
    %c0_3 = arith.constant 0 : index
    %c0_4 = arith.constant 0 : index
    %9 = vector.load %arg4[%c0_3, %c0_4] : memref<16x256xf32, #tpu.memory_space<vmem>>, vector<1x256xf32>
    %10 = vector.broadcast %9 : vector<1x256xf32> to vector<32x256xf32>
    %11 = arith.mulf %8, %10 : vector<32x256xf32>
    %12 = arith.truncf %11 : vector<32x256xf32> to vector<32x256xbf16>
    %c0_5 = arith.constant 0 : index
    %c0_6 = arith.constant 0 : index
    %13 = vector.load %arg11[%c0_5, %c0_6] : memref<512x256xbf16, #tpu.memory_space<vmem>>, vector<32x256xbf16>
    tpu.vector_store %arg11[%c0_5, %c0_6], %12 {strides = array<i32>} : memref<512x256xbf16, #tpu.memory_space<vmem>>, vector<32x256xbf16>,
    %c4_i32 = arith.constant 4 : i32
    %14 = vector.broadcast %c4_i32 : i32 to vector<32x256xi32>
    %15 = arith.shrsi %3, %14 : vector<32x256xi32>
    %c15_i32_7 = arith.constant 15 : i32
    %16 = vector.broadcast %c15_i32_7 : i32 to vector<32x256xi32>
    %17 = arith.andi %15, %16 : vector<32x256xi32>
    %18 = arith.sitofp %17 : vector<32x256xi32> to vector<32x256xf32>
    %c2 = arith.constant 2 : index
    %c0_8 = arith.constant 0 : index
    %19 = vector.load %arg4[%c2, %c0_8] : memref<16x256xf32, #tpu.memory_space<vmem>>, vector<1x256xf32>
    %20 = vector.broadcast %19 : vector<1x256xf32> to vector<32x256xf32>
    %21 = arith.mulf %18, %20 : vector<32x256xf32>
    %22 = arith.truncf %21 : vector<32x256xf32> to vector<32x256xbf16>
    %c64 = arith.constant 64 : index
    %c0_9 = arith.constant 0 : index
    %23 = vector.load %arg11[%c64, %c0_9] : memref<512x256xbf16, #tpu.memory_space<vmem>>, vector<32x256xbf16>
    tpu.vector_store %arg11[%c64, %c0_9], %22 {strides = array<i32>} : memref<512x256xbf16, #tpu.memory_space<vmem>>, vector<32x256xbf16>,
    %c8_i32 = arith.constant 8 : i32
    %24 = vector.broadcast %c8_i32 : i32 to vector<32x256xi32>
    %25 = arith.shrsi %3, %24 : vector<32x256xi32>
    %c15_i32_10 = arith.constant 15 : i32
    %26 = vector.broadcast %c15_i32_10 : i32 to vector<32x256xi32>
    %27 = arith.andi %25, %26 : vector<32x256xi32>
    %28 = arith.sitofp %27 : vector<32x256xi32> to vector<32x256xf32>
    %c4 = arith.constant 4 : index
    %c0_11 = arith.constant 0 : index
    %29 = vector.load %arg4[%c4, %c0_11] : memref<16x256xf32, #tpu.memory_space<vmem>>, vector<1x256xf32>
    %30 = vector.broadcast %29 : vector<1x256xf32> to vector<32x256xf32>
    %31 = arith.mulf %28, %30 : vector<32x256xf32>
    %32 = arith.truncf %31 : vector<32x256xf32> to vector<32x256xbf16>
    %c128 = arith.constant 128 : index
    %c0_12 = arith.constant 0 : index
    %33 = vector.load %arg11[%c128, %c0_12] : memref<512x256xbf16, #tpu.memory_space<vmem>>, vector<32x256xbf16>
    tpu.vector_store %arg11[%c128, %c0_12], %32 {strides = array<i32>} : memref<512x256xbf16, #tpu.memory_space<vmem>>, vector<32x256xbf16>,
    %c12_i32 = arith.constant 12 : i32
    %34 = vector.broadcast %c12_i32 : i32 to vector<32x256xi32>
    %35 = arith.shrsi %3, %34 : vector<32x256xi32>
    %c15_i32_13 = arith.constant 15 : i32
    %36 = vector.broadcast %c15_i32_13 : i32 to vector<32x256xi32>
    %37 = arith.andi %35, %36 : vector<32x256xi32>
    %38 = arith.sitofp %37 : vector<32x256xi32> to vector<32x256xf32>
    %c6 = arith.constant 6 : index
    %c0_14 = arith.constant 0 : index
    %39 = vector.load %arg4[%c6, %c0_14] : memref<16x256xf32, #tpu.memory_space<vmem>>, vector<1x256xf32>
    %40 = vector.broadcast %39 : vector<1x256xf32> to vector<32x256xf32>
    %41 = arith.mulf %38, %40 : vector<32x256xf32>
    %42 = arith.truncf %41 : vector<32x256xf32> to vector<32x256xbf16>
    %c192 = arith.constant 192 : index
    %c0_15 = arith.constant 0 : index
    %43 = vector.load %arg11[%c192, %c0_15] : memref<512x256xbf16, #tpu.memory_space<vmem>>, vector<32x256xbf16>
    tpu.vector_store %arg11[%c192, %c0_15], %42 {strides = array<i32>} : memref<512x256xbf16, #tpu.memory_space<vmem>>, vector<32x256xbf16>,
    %c16_i32 = arith.constant 16 : i32
    %44 = vector.broadcast %c16_i32 : i32 to vector<32x256xi32>
    %45 = arith.shrsi %3, %44 : vector<32x256xi32>
    %c15_i32_16 = arith.constant 15 : i32
    %46 = vector.broadcast %c15_i32_16 : i32 to vector<32x256xi32>
    %47 = arith.andi %45, %46 : vector<32x256xi32>
    %48 = arith.sitofp %47 : vector<32x256xi32> to vector<32x256xf32>
    %c8 = arith.constant 8 : index
    %c0_17 = arith.constant 0 : index
    %49 = vector.load %arg4[%c8, %c0_17] : memref<16x256xf32, #tpu.memory_space<vmem>>, vector<1x256xf32>
    %50 = vector.broadcast %49 : vector<1x256xf32> to vector<32x256xf32>
    %51 = arith.mulf %48, %50 : vector<32x256xf32>
    %52 = arith.truncf %51 : vector<32x256xf32> to vector<32x256xbf16>
    %c256 = arith.constant 256 : index
    %c0_18 = arith.constant 0 : index
    %53 = vector.load %arg11[%c256, %c0_18] : memref<512x256xbf16, #tpu.memory_space<vmem>>, vector<32x256xbf16>
    tpu.vector_store %arg11[%c256, %c0_18], %52 {strides = array<i32>} : memref<512x256xbf16, #tpu.memory_space<vmem>>, vector<32x256xbf16>,
    %c20_i32 = arith.constant 20 : i32
    %54 = vector.broadcast %c20_i32 : i32 to vector<32x256xi32>
    %55 = arith.shrsi %3, %54 : vector<32x256xi32>
    %c15_i32_19 = arith.constant 15 : i32
    %56 = vector.broadcast %c15_i32_19 : i32 to vector<32x256xi32>
    %57 = arith.andi %55, %56 : vector<32x256xi32>
    %58 = arith.sitofp %57 : vector<32x256xi32> to vector<32x256xf32>
    %c10 = arith.constant 10 : index
    %c0_20 = arith.constant 0 : index
    %59 = vector.load %arg4[%c10, %c0_20] : memref<16x256xf32, #tpu.memory_space<vmem>>, vector<1x256xf32>
    %60 = vector.broadcast %59 : vector<1x256xf32> to vector<32x256xf32>
    %61 = arith.mulf %58, %60 : vector<32x256xf32>
    %62 = arith.truncf %61 : vector<32x256xf32> to vector<32x256xbf16>
    %c320 = arith.constant 320 : index
    %c0_21 = arith.constant 0 : index
    %63 = vector.load %arg11[%c320, %c0_21] : memref<512x256xbf16, #tpu.memory_space<vmem>>, vector<32x256xbf16>
    tpu.vector_store %arg11[%c320, %c0_21], %62 {strides = array<i32>} : memref<512x256xbf16, #tpu.memory_space<vmem>>, vector<32x256xbf16>,
    %c24_i32 = arith.constant 24 : i32
    %64 = vector.broadcast %c24_i32 : i32 to vector<32x256xi32>
    %65 = arith.shrsi %3, %64 : vector<32x256xi32>
    %c15_i32_22 = arith.constant 15 : i32
    %66 = vector.broadcast %c15_i32_22 : i32 to vector<32x256xi32>
    %67 = arith.andi %65, %66 : vector<32x256xi32>
    %68 = arith.sitofp %67 : vector<32x256xi32> to vector<32x256xf32>
    %c12 = arith.constant 12 : index
    %c0_23 = arith.constant 0 : index
    %69 = vector.load %arg4[%c12, %c0_23] : memref<16x256xf32, #tpu.memory_space<vmem>>, vector<1x256xf32>
    %70 = vector.broadcast %69 : vector<1x256xf32> to vector<32x256xf32>
    %71 = arith.mulf %68, %70 : vector<32x256xf32>
    %72 = arith.truncf %71 : vector<32x256xf32> to vector<32x256xbf16>
    %c384 = arith.constant 384 : index
    %c0_24 = arith.constant 0 : index
    %73 = vector.load %arg11[%c384, %c0_24] : memref<512x256xbf16, #tpu.memory_space<vmem>>, vector<32x256xbf16>
    tpu.vector_store %arg11[%c384, %c0_24], %72 {strides = array<i32>} : memref<512x256xbf16, #tpu.memory_space<vmem>>, vector<32x256xbf16>,
    %c28_i32 = arith.constant 28 : i32
    %74 = vector.broadcast %c28_i32 : i32 to vector<32x256xi32>
    %75 = arith.shrsi %3, %74 : vector<32x256xi32>
    %c15_i32_25 = arith.constant 15 : i32
    %76 = vector.broadcast %c15_i32_25 : i32 to vector<32x256xi32>
    %77 = arith.andi %75, %76 : vector<32x256xi32>
    %78 = arith.sitofp %77 : vector<32x256xi32> to vector<32x256xf32>
    %c14 = arith.constant 14 : index
    %c0_26 = arith.constant 0 : index
    %79 = vector.load %arg4[%c14, %c0_26] : memref<16x256xf32, #tpu.memory_space<vmem>>, vector<1x256xf32>
    %80 = vector.broadcast %79 : vector<1x256xf32> to vector<32x256xf32>
    %81 = arith.mulf %78, %80 : vector<32x256xf32>
    %82 = arith.truncf %81 : vector<32x256xf32> to vector<32x256xbf16>
    %c448 = arith.constant 448 : index
    %c0_27 = arith.constant 0 : index
    %83 = vector.load %arg11[%c448, %c0_27] : memref<512x256xbf16, #tpu.memory_space<vmem>>, vector<32x256xbf16>
    tpu.vector_store %arg11[%c448, %c0_27], %82 {strides = array<i32>} : memref<512x256xbf16, #tpu.memory_space<vmem>>, vector<32x256xbf16>,
    %c32 = arith.constant 32 : index
    %c0_28 = arith.constant 0 : index
    %84 = vector.load %arg3[%c32, %c0_28] : memref<64x256xi32, #tpu.memory_space<vmem>>, vector<32x256xi32>
    %c0_i32_29 = arith.constant 0 : i32
    %85 = vector.broadcast %c0_i32_29 : i32 to vector<32x256xi32>
    %86 = arith.shrsi %84, %85 : vector<32x256xi32>
    %c15_i32_30 = arith.constant 15 : i32
    %87 = vector.broadcast %c15_i32_30 : i32 to vector<32x256xi32>
    %88 = arith.andi %86, %87 : vector<32x256xi32>
    %89 = arith.sitofp %88 : vector<32x256xi32> to vector<32x256xf32>
    %c1 = arith.constant 1 : index
    %c0_31 = arith.constant 0 : index
    %90 = vector.load %arg4[%c1, %c0_31] : memref<16x256xf32, #tpu.memory_space<vmem>>, vector<1x256xf32>
    %91 = vector.broadcast %90 : vector<1x256xf32> to vector<32x256xf32>
    %92 = arith.mulf %89, %91 : vector<32x256xf32>
    %93 = arith.truncf %92 : vector<32x256xf32> to vector<32x256xbf16>
    %c32_32 = arith.constant 32 : index
    %c0_33 = arith.constant 0 : index
    %94 = vector.load %arg11[%c32_32, %c0_33] : memref<512x256xbf16, #tpu.memory_space<vmem>>, vector<32x256xbf16>
    tpu.vector_store %arg11[%c32_32, %c0_33], %93 {strides = array<i32>} : memref<512x256xbf16, #tpu.memory_space<vmem>>, vector<32x256xbf16>,
    %c4_i32_34 = arith.constant 4 : i32
    %95 = vector.broadcast %c4_i32_34 : i32 to vector<32x256xi32>
    %96 = arith.shrsi %84, %95 : vector<32x256xi32>
    %c15_i32_35 = arith.constant 15 : i32
    %97 = vector.broadcast %c15_i32_35 : i32 to vector<32x256xi32>
    %98 = arith.andi %96, %97 : vector<32x256xi32>
    %99 = arith.sitofp %98 : vector<32x256xi32> to vector<32x256xf32>
    %c3 = arith.constant 3 : index
    %c0_36 = arith.constant 0 : index
    %100 = vector.load %arg4[%c3, %c0_36] : memref<16x256xf32, #tpu.memory_space<vmem>>, vector<1x256xf32>
    %101 = vector.broadcast %100 : vector<1x256xf32> to vector<32x256xf32>
    %102 = arith.mulf %99, %101 : vector<32x256xf32>
    %103 = arith.truncf %102 : vector<32x256xf32> to vector<32x256xbf16>
    %c96 = arith.constant 96 : index
    %c0_37 = arith.constant 0 : index
    %104 = vector.load %arg11[%c96, %c0_37] : memref<512x256xbf16, #tpu.memory_space<vmem>>, vector<32x256xbf16>
    tpu.vector_store %arg11[%c96, %c0_37], %103 {strides = array<i32>} : memref<512x256xbf16, #tpu.memory_space<vmem>>, vector<32x256xbf16>,
    %c8_i32_38 = arith.constant 8 : i32
    %105 = vector.broadcast %c8_i32_38 : i32 to vector<32x256xi32>
    %106 = arith.shrsi %84, %105 : vector<32x256xi32>
    %c15_i32_39 = arith.constant 15 : i32
    %107 = vector.broadcast %c15_i32_39 : i32 to vector<32x256xi32>
    %108 = arith.andi %106, %107 : vector<32x256xi32>
    %109 = arith.sitofp %108 : vector<32x256xi32> to vector<32x256xf32>
    %c5 = arith.constant 5 : index
    %c0_40 = arith.constant 0 : index
    %110 = vector.load %arg4[%c5, %c0_40] : memref<16x256xf32, #tpu.memory_space<vmem>>, vector<1x256xf32>
    %111 = vector.broadcast %110 : vector<1x256xf32> to vector<32x256xf32>
    %112 = arith.mulf %109, %111 : vector<32x256xf32>
    %113 = arith.truncf %112 : vector<32x256xf32> to vector<32x256xbf16>
    %c160 = arith.constant 160 : index
    %c0_41 = arith.constant 0 : index
    %114 = vector.load %arg11[%c160, %c0_41] : memref<512x256xbf16, #tpu.memory_space<vmem>>, vector<32x256xbf16>
    tpu.vector_store %arg11[%c160, %c0_41], %113 {strides = array<i32>} : memref<512x256xbf16, #tpu.memory_space<vmem>>, vector<32x256xbf16>,
    %c12_i32_42 = arith.constant 12 : i32
    %115 = vector.broadcast %c12_i32_42 : i32 to vector<32x256xi32>
    %116 = arith.shrsi %84, %115 : vector<32x256xi32>
    %c15_i32_43 = arith.constant 15 : i32
    %117 = vector.broadcast %c15_i32_43 : i32 to vector<32x256xi32>
    %118 = arith.andi %116, %117 : vector<32x256xi32>
    %119 = arith.sitofp %118 : vector<32x256xi32> to vector<32x256xf32>
    %c7 = arith.constant 7 : index
    %c0_44 = arith.constant 0 : index
    %120 = vector.load %arg4[%c7, %c0_44] : memref<16x256xf32, #tpu.memory_space<vmem>>, vector<1x256xf32>
    %121 = vector.broadcast %120 : vector<1x256xf32> to vector<32x256xf32>
    %122 = arith.mulf %119, %121 : vector<32x256xf32>
    %123 = arith.truncf %122 : vector<32x256xf32> to vector<32x256xbf16>
    %c224 = arith.constant 224 : index
    %c0_45 = arith.constant 0 : index
    %124 = vector.load %arg11[%c224, %c0_45] : memref<512x256xbf16, #tpu.memory_space<vmem>>, vector<32x256xbf16>
    tpu.vector_store %arg11[%c224, %c0_45], %123 {strides = array<i32>} : memref<512x256xbf16, #tpu.memory_space<vmem>>, vector<32x256xbf16>,
    %c16_i32_46 = arith.constant 16 : i32
    %125 = vector.broadcast %c16_i32_46 : i32 to vector<32x256xi32>
    %126 = arith.shrsi %84, %125 : vector<32x256xi32>
    %c15_i32_47 = arith.constant 15 : i32
    %127 = vector.broadcast %c15_i32_47 : i32 to vector<32x256xi32>
    %128 = arith.andi %126, %127 : vector<32x256xi32>
    %129 = arith.sitofp %128 : vector<32x256xi32> to vector<32x256xf32>
    %c9 = arith.constant 9 : index
    %c0_48 = arith.constant 0 : index
    %130 = vector.load %arg4[%c9, %c0_48] : memref<16x256xf32, #tpu.memory_space<vmem>>, vector<1x256xf32>
    %131 = vector.broadcast %130 : vector<1x256xf32> to vector<32x256xf32>
    %132 = arith.mulf %129, %131 : vector<32x256xf32>
    %133 = arith.truncf %132 : vector<32x256xf32> to vector<32x256xbf16>
    %c288 = arith.constant 288 : index
    %c0_49 = arith.constant 0 : index
    %134 = vector.load %arg11[%c288, %c0_49] : memref<512x256xbf16, #tpu.memory_space<vmem>>, vector<32x256xbf16>
    tpu.vector_store %arg11[%c288, %c0_49], %133 {strides = array<i32>} : memref<512x256xbf16, #tpu.memory_space<vmem>>, vector<32x256xbf16>,
    %c20_i32_50 = arith.constant 20 : i32
    %135 = vector.broadcast %c20_i32_50 : i32 to vector<32x256xi32>
    %136 = arith.shrsi %84, %135 : vector<32x256xi32>
    %c15_i32_51 = arith.constant 15 : i32
    %137 = vector.broadcast %c15_i32_51 : i32 to vector<32x256xi32>
    %138 = arith.andi %136, %137 : vector<32x256xi32>
    %139 = arith.sitofp %138 : vector<32x256xi32> to vector<32x256xf32>
    %c11 = arith.constant 11 : index
    %c0_52 = arith.constant 0 : index
    %140 = vector.load %arg4[%c11, %c0_52] : memref<16x256xf32, #tpu.memory_space<vmem>>, vector<1x256xf32>
    %141 = vector.broadcast %140 : vector<1x256xf32> to vector<32x256xf32>
    %142 = arith.mulf %139, %141 : vector<32x256xf32>
    %143 = arith.truncf %142 : vector<32x256xf32> to vector<32x256xbf16>
    %c352 = arith.constant 352 : index
    %c0_53 = arith.constant 0 : index
    %144 = vector.load %arg11[%c352, %c0_53] : memref<512x256xbf16, #tpu.memory_space<vmem>>, vector<32x256xbf16>
    tpu.vector_store %arg11[%c352, %c0_53], %143 {strides = array<i32>} : memref<512x256xbf16, #tpu.memory_space<vmem>>, vector<32x256xbf16>,
    %c24_i32_54 = arith.constant 24 : i32
    %145 = vector.broadcast %c24_i32_54 : i32 to vector<32x256xi32>
    %146 = arith.shrsi %84, %145 : vector<32x256xi32>
    %c15_i32_55 = arith.constant 15 : i32
    %147 = vector.broadcast %c15_i32_55 : i32 to vector<32x256xi32>
    %148 = arith.andi %146, %147 : vector<32x256xi32>
    %149 = arith.sitofp %148 : vector<32x256xi32> to vector<32x256xf32>
    %c13 = arith.constant 13 : index
    %c0_56 = arith.constant 0 : index
    %150 = vector.load %arg4[%c13, %c0_56] : memref<16x256xf32, #tpu.memory_space<vmem>>, vector<1x256xf32>
    %151 = vector.broadcast %150 : vector<1x256xf32> to vector<32x256xf32>
    %152 = arith.mulf %149, %151 : vector<32x256xf32>
    %153 = arith.truncf %152 : vector<32x256xf32> to vector<32x256xbf16>
    %c416 = arith.constant 416 : index
    %c0_57 = arith.constant 0 : index
    %154 = vector.load %arg11[%c416, %c0_57] : memref<512x256xbf16, #tpu.memory_space<vmem>>, vector<32x256xbf16>
    tpu.vector_store %arg11[%c416, %c0_57], %153 {strides = array<i32>} : memref<512x256xbf16, #tpu.memory_space<vmem>>, vector<32x256xbf16>,
    %c28_i32_58 = arith.constant 28 : i32
    %155 = vector.broadcast %c28_i32_58 : i32 to vector<32x256xi32>
    %156 = arith.shrsi %84, %155 : vector<32x256xi32>
    %c15_i32_59 = arith.constant 15 : i32
    %157 = vector.broadcast %c15_i32_59 : i32 to vector<32x256xi32>
    %158 = arith.andi %156, %157 : vector<32x256xi32>
    %159 = arith.sitofp %158 : vector<32x256xi32> to vector<32x256xf32>
    %c15 = arith.constant 15 : index
    %c0_60 = arith.constant 0 : index
    %160 = vector.load %arg4[%c15, %c0_60] : memref<16x256xf32, #tpu.memory_space<vmem>>, vector<1x256xf32>
    %161 = vector.broadcast %160 : vector<1x256xf32> to vector<32x256xf32>
    %162 = arith.mulf %159, %161 : vector<32x256xf32>
    %163 = arith.truncf %162 : vector<32x256xf32> to vector<32x256xbf16>
    %c480 = arith.constant 480 : index
    %c0_61 = arith.constant 0 : index
    %164 = vector.load %arg11[%c480, %c0_61] : memref<512x256xbf16, #tpu.memory_space<vmem>>, vector<32x256xbf16>
    tpu.vector_store %arg11[%c480, %c0_61], %163 {strides = array<i32>} : memref<512x256xbf16, #tpu.memory_space<vmem>>, vector<32x256xbf16>,
    %c0_62 = arith.constant 0 : index
    %c0_63 = arith.constant 0 : index
    %165 = vector.load %arg9[%c0_62, %c0_63] : memref<8x512xbf16, #tpu.memory_space<vmem>>, vector<8x512xbf16>
    %c0_64 = arith.constant 0 : index
    %c0_65 = arith.constant 0 : index
    %166 = vector.load %arg11[%c0_64, %c0_65] : memref<512x256xbf16, #tpu.memory_space<vmem>>, vector<512x256xbf16>
    %cst = arith.constant dense<0.000000e+00> : vector<8x256xf32>
    %167 = tpu.matmul %165, %166, %cst {dimension_numbers = #tpu.dot_dimension_numbers<[1], [0], [0], [1], [0, 0, 1, 1], [], []>} : vector<8x512xbf16>, vector<512x256xbf16>, vector<8x256xf32> -> vector<8x256xf32>
    %c0_66 = arith.constant 0 : index
    %c0_67 = arith.constant 0 : index
    %168 = vector.load %arg10[%c0_66, %c0_67] : memref<8x16xf32, #tpu.memory_space<vmem>>, vector<8x16xf32>
    %c0_68 = arith.constant 0 : index
    %c0_69 = arith.constant 0 : index
    %169 = vector.load %arg5[%c0_68, %c0_69] : memref<16x256xf32, #tpu.memory_space<vmem>>, vector<16x256xf32>
    %cst_70 = arith.constant dense<0.000000e+00> : vector<8x256xf32>
    %170 = tpu.matmul %168, %169, %cst_70 {dimension_numbers = #tpu.dot_dimension_numbers<[1], [0], [0], [1], [0, 0, 1, 1], [], []>} : vector<8x16xf32>, vector<16x256xf32>, vector<8x256xf32> -> vector<8x256xf32>
    %171 = arith.subf %167, %170 : vector<8x256xf32>
    %c0_71 = arith.constant 0 : index
    %c0_72 = arith.constant 0 : index
    %172 = vector.load %arg6[%c0_71, %c0_72] : memref<1x256xf32, #tpu.memory_space<vmem>>, vector<1x256xf32>
    %173 = vector.broadcast %172 : vector<1x256xf32> to vector<8x256xf32>
    %174 = arith.addf %171, %173 : vector<8x256xf32>
    %175 = arith.negf %174 : vector<8x256xf32>
    %176 = math.exp %175 : vector<8x256xf32>
    %cst_73 = arith.constant 1.000000e+00 : f32
    %177 = vector.broadcast %cst_73 : f32 to vector<8x256xf32>
    %178 = arith.addf %177, %176 : vector<8x256xf32>
    %179 = arith.divf %177, %178 : vector<8x256xf32>
    %180 = arith.mulf %174, %179 : vector<8x256xf32>
    %c0_74 = arith.constant 0 : index
    %c0_75 = arith.constant 0 : index
    %181 = vector.load %arg7[%c0_74, %c0_75] : memref<8x256xf32, #tpu.memory_space<vmem>>, vector<8x256xf32>
    %182 = arith.mulf %180, %181 : vector<8x256xf32>
    %c0_76 = arith.constant 0 : index
    %c0_77 = arith.constant 0 : index
    %183 = vector.load %arg8[%c0_76, %c0_77] : memref<8x256xf32, #tpu.memory_space<vmem>>, vector<8x256xf32>
    tpu.vector_store %arg8[%c0_76, %c0_77], %182 {strides = array<i32>} : memref<8x256xf32, #tpu.memory_space<vmem>>, vector<8x256xf32>,
    return
  }
  func.func @transform_0(%arg0: i32, %arg1: i32) -> (i32, i32) {
    %c0_i32 = arith.constant 0 : i32
    %c0_i32_0 = arith.constant 0 : i32
    return %arg0, %c0_i32 : i32, i32
  }
  func.func @transform_1(%arg0: i32, %arg1: i32) -> (i32, i32) {
    %c0_i32 = arith.constant 0 : i32
    %c0_i32_0 = arith.constant 0 : i32
    return %c0_i32, %arg1 : i32, i32
  }
  func.func @transform_2(%arg0: i32, %arg1: i32) -> (i32, i32) {
    %c0_i32 = arith.constant 0 : i32
    %c0_i32_0 = arith.constant 0 : i32
    return %c0_i32, %arg1 : i32, i32
  }
  func.func @transform_3(%arg0: i32, %arg1: i32) -> (i32, i32) {
    %c0_i32 = arith.constant 0 : i32
    %c0_i32_0 = arith.constant 0 : i32
    return %c0_i32, %arg1 : i32, i32
  }
  func.func @transform_4(%arg0: i32, %arg1: i32) -> (i32, i32) {
    %c0_i32 = arith.constant 0 : i32
    %c0_i32_0 = arith.constant 0 : i32
    return %c0_i32, %arg1 : i32, i32
  }
  func.func @transform_5(%arg0: i32, %arg1: i32) -> (i32, i32) {
    %c0_i32 = arith.constant 0 : i32
    return %arg0, %arg1 : i32, i32
  }
  func.func @transform_6(%arg0: i32, %arg1: i32) -> (i32, i32) {
    %c0_i32 = arith.constant 0 : i32
    return %arg0, %arg1 : i32, i32
  }
}

</mosaic_0001>

<llo_original>
// kernel: tpu_custom_call.1
$region0: #{tpu_custom_call.1}
  #allocation0 [shape = 'u32[]', space=smem, size = 0x4, offset = 0x4, fixed_abs, tag = 'smem constant byte address 0x4 - core index']
  #allocation1 [shape = 'u32[144,128]{1,0:T(1,128)}', space=vmem, size = 0x12000, scoped, tag = 'internal scratch']
  #allocation2 [shape = 'bf16[8,512]{1,0:T(8,128)(2,1)}', space=vmem, size = 0x2000, scoped, tag = 'scratch operand']
  #allocation3 [shape = 'f32[8,16]{1,0:T(8,128)}', space=vmem, size = 0x1000, scoped, tag = 'scratch operand']
  #allocation4 [shape = 'bf16[512,256]{1,0:T(8,128)(2,1)}', space=vmem, size = 0x40000, scoped, tag = 'scratch operand']
  %s0 = inlined_call_operand.hbm [shape: f32[8,512], index: 0, kind: input, shape index: {}]
  %s1 = inlined_call_operand.hbm [shape: s32[64,512], index: 1, kind: input, shape index: {}]
  %s2 = inlined_call_operand.hbm [shape: f32[16,512], index: 2, kind: input, shape index: {}]
  %s3 = inlined_call_operand.hbm [shape: f32[16,512], index: 3, kind: input, shape index: {}]
  %s4 = inlined_call_operand.vmem [shape: f32[1,512], index: 4, kind: input, shape index: {}]
  %s5 = inlined_call_operand.hbm [shape: f32[8,512], index: 5, kind: input, shape index: {}]
  %s6 = inlined_call_operand.hbm [shape: f32[8,512], index: 6, kind: output, shape index: {}]
  %s7 = sld [smem:[#allocation0]]
  $region81: #{tpu_custom_call.1} parent=0
    _
  %s9 = ssub.s32 1, %s7
  %s10 = scalar_select 0, %s9, %s7
  $region1: #{tpu_custom_call.1} parent=0
    #allocation5 [shape = 'u8[16384]{0}', space=vmem, size = 0x4000, scoped, tag = 'input window, operand 0, single buffered']
    #allocation6 [shape = 's32[2]{0}', space=sflag, size = 0x8, scoped, tag = 'scoped memory for tpu_custom_call.1']
    #allocation7 [shape = 's32[2]{0}', space=sflag, size = 0x8, scoped, tag = 'scoped memory for tpu_custom_call.1']
    #allocation8 [shape = 'u8[131072]{0}', space=vmem, size = 0x20000, scoped, tag = 'input window, operand 1']
    #allocation9 [shape = 's32[2]{0}', space=sflag, size = 0x8, scoped, tag = 'scoped memory for tpu_custom_call.1']
    #allocation10 [shape = 'u8[32768]{0}', space=vmem, size = 0x8000, scoped, tag = 'input window, operand 2']
    #allocation11 [shape = 'u8[32768]{0}', space=vmem, size = 0x8000, scoped, tag = 'input window, operand 3']
    #allocation12 [shape = 's32[2]{0}', space=sflag, size = 0x8, scoped, tag = 'scoped memory for tpu_custom_call.1']
    #allocation13 [shape = 'u8[16384]{0}', space=vmem, size = 0x4000, scoped, tag = 'input window, operand 5']
    #allocation14 [shape = 'u8[16384]{0}', space=vmem, size = 0x4000, scoped, tag = 'output window, operand 0']
    %11 = vsyncpa [#allocation6], 0
    %12 = vsyncpa [#allocation9], 0
    %s13 = scalar_lea.sflag [#allocation9], 1
    %14 = vsyncpa %s13, 0
    %15 = vsyncpa [#allocation12], 0
    %s16 = scalar_lea.sflag [#allocation12], 1
    %17 = vsyncpa %s16, 0
    %18 = vsyncpa [#allocation7], 0
    %s19 = scalar_lea.sflag [#allocation7], 1
    %20 = vsyncpa %s19, 0
    loop: start=0, step=1, limit=4
    $region2: #{tpu_custom_call.1} parent=1 // loop_pre_header
      _
    $region3: #{tpu_custom_call.1} parent=1 // loop_header
      %s22 = sphi 0, %s26
      %p23 = scmp.ge.s32.totalorder %s22, 4
      %s29 = sphi 0, %s41
      %s30 = sphi 0, %s37
      %s31 = sphi 0, %s29
      %s32 = sphi 0, %s30
      %s33 = sphi 0, %s31
      %s34 = sphi 0, %s32
      %s44 = sphi 0, %s46
      %s47 = sphi 0, %s44
      %s48 = sphi 0, %s47
      %s64 = sphi 0, %s48
      %s70 = sphi 0, %s72
      %s73 = sphi 0, %s70
      %s74 = sphi 0, %s73
      %s90 = sphi 0, %s74
      %s96 = sphi 0, %s98
      %s99 = sphi 0, %s96
      %s100 = sphi 0, %s99
      %s116 = sphi 0, %s100
      %s122 = sphi 0, %s124
      %s125 = sphi 0, %s122
      %s126 = sphi 0, %s125
      %s142 = sphi 0, %s126
      %s148 = sphi 0, %s150
      %s151 = sphi 0, %s148
      %s152 = sphi 0, %s151
      %s168 = sphi 0, %s152
      %s176 = sphi 0, %s178
      %s179 = sphi 0, %s176
      %s180 = sphi 0, %s179
      %s196 = sphi 0, %s180
      %s204 = sphi 0, %s206
      %s207 = sphi 0, %s204
      %s208 = sphi 0, %s207
      %s224 = sphi 0, %s208
    $region4: #{tpu_custom_call.1} parent=1 // loop_header_branch
      %25 = sbr.rel (%p23) target = $region8
    $region5: #{tpu_custom_call.1} parent=1 // loop_body
      %s27 = ssub.s32 %s22, 1
      %s28 = ssub.s32 %s22, 2
      %s35 = sadd.s32 1, %s30
      %p36 = scmp.ge.s32.totalorder %s35, 2
      %s37 = scalar_select %p36, 0, %s35
      %s38 = sadd.s32 1, %s29
      %s39 = scalar_select %p36, %s38, %s29
      %p40 = scmp.ge.s32.totalorder %s39, 1
      %s41 = scalar_select %p40, 0, %s39
      %s42 = ssub.s32 %s29, %s41
      %p43 = scmp.eq.s32.totalorder %s42, 0
      %s45 = sadd.s32 %s44, 1
      %s46 = scalar_select %p43, %s44, %s45
      %p49 = pneg %p43
      %p50 = scmp.eq.s32.totalorder %s22, 1
      %p51 = por %p49, %p50
      %p52 = scmp.ne.s32.totalorder %s44, %s47
      %p53 = scmp.eq.s32.totalorder %s22, 0
      %p54 = por %p52, %p53
      %p55 = scmp.ne.s32.totalorder %s44, %s47
      %p56 = scmp.eq.s32.totalorder %s27, 1
      %p57 = por %p55, %p56
      %p58 = scmp.ne.s32.totalorder %s47, %s48
      %p59 = scmp.eq.s32.totalorder %s27, 0
      %p60 = por %p58, %p59
      %p61 = scmp.ne.s32.totalorder %s47, %s48
      %p62 = scmp.eq.s32.totalorder %s28, 1
      %p63 = por %p61, %p62
      %p65 = scmp.ne.s32.totalorder %s48, %s64
      %p66 = scmp.eq.s32.totalorder %s28, 0
      %p67 = por %p65, %p66
      %s68 = ssub.s32 %s30, %s37
      %p69 = scmp.eq.s32.totalorder %s68, 0
      %s71 = sadd.s32 %s70, 1
      %s72 = scalar_select %p69, %s70, %s71
      %p75 = pneg %p69
      %p76 = scmp.eq.s32.totalorder %s22, 1
      %p77 = por %p75, %p76
      %p78 = scmp.ne.s32.totalorder %s70, %s73
      %p79 = scmp.eq.s32.totalorder %s22, 0
      %p80 = por %p78, %p79
      %p81 = scmp.ne.s32.totalorder %s70, %s73
      %p82 = scmp.eq.s32.totalorder %s27, 1
      %p83 = por %p81, %p82
      %p84 = scmp.ne.s32.totalorder %s73, %s74
      %p85 = scmp.eq.s32.totalorder %s27, 0
      %p86 = por %p84, %p85
      %p87 = scmp.ne.s32.totalorder %s73, %s74
      %p88 = scmp.eq.s32.totalorder %s28, 1
      %p89 = por %p87, %p88
      %p91 = scmp.ne.s32.totalorder %s74, %s90
      %p92 = scmp.eq.s32.totalorder %s28, 0
      %p93 = por %p91, %p92
      %s94 = ssub.s32 %s30, %s37
      %p95 = scmp.eq.s32.totalorder %s94, 0
      %s97 = sadd.s32 %s96, 1
      %s98 = scalar_select %p95, %s96, %s97
      %p101 = pneg %p95
      %p102 = scmp.eq.s32.totalorder %s22, 1
      %p103 = por %p101, %p102
      %p104 = scmp.ne.s32.totalorder %s96, %s99
      %p105 = scmp.eq.s32.totalorder %s22, 0
      %p106 = por %p104, %p105
      %p107 = scmp.ne.s32.totalorder %s96, %s99
      %p108 = scmp.eq.s32.totalorder %s27, 1
      %p109 = por %p107, %p108
      %p110 = scmp.ne.s32.totalorder %s99, %s100
      %p111 = scmp.eq.s32.totalorder %s27, 0
      %p112 = por %p110, %p111
      %p113 = scmp.ne.s32.totalorder %s99, %s100
      %p114 = scmp.eq.s32.totalorder %s28, 1
      %p115 = por %p113, %p114
      %p117 = scmp.ne.s32.totalorder %s100, %s116
      %p118 = scmp.eq.s32.totalorder %s28, 0
      %p119 = por %p117, %p118
      %s120 = ssub.s32 %s30, %s37
      %p121 = scmp.eq.s32.totalorder %s120, 0
      %s123 = sadd.s32 %s122, 1
      %s124 = scalar_select %p121, %s122, %s123
      %p127 = pneg %p121
      %p128 = scmp.eq.s32.totalorder %s22, 1
      %p129 = por %p127, %p128
      %p130 = scmp.ne.s32.totalorder %s122, %s125
      %p131 = scmp.eq.s32.totalorder %s22, 0
      %p132 = por %p130, %p131
      %p133 = scmp.ne.s32.totalorder %s122, %s125
      %p134 = scmp.eq.s32.totalorder %s27, 1
      %p135 = por %p133, %p134
      %p136 = scmp.ne.s32.totalorder %s125, %s126
      %p137 = scmp.eq.s32.totalorder %s27, 0
      %p138 = por %p136, %p137
      %p139 = scmp.ne.s32.totalorder %s125, %s126
      %p140 = scmp.eq.s32.totalorder %s28, 1
      %p141 = por %p139, %p140
      %p143 = scmp.ne.s32.totalorder %s126, %s142
      %p144 = scmp.eq.s32.totalorder %s28, 0
      %p145 = por %p143, %p144
      %s146 = ssub.s32 %s30, %s37
      %p147 = scmp.eq.s32.totalorder %s146, 0
      %s149 = sadd.s32 %s148, 1
      %s150 = scalar_select %p147, %s148, %s149
      %p153 = pneg %p147
      %p154 = scmp.eq.s32.totalorder %s22, 1
      %p155 = por %p153, %p154
      %p156 = scmp.ne.s32.totalorder %s148, %s151
      %p157 = scmp.eq.s32.totalorder %s22, 0
      %p158 = por %p156, %p157
      %p159 = scmp.ne.s32.totalorder %s148, %s151
      %p160 = scmp.eq.s32.totalorder %s27, 1
      %p161 = por %p159, %p160
      %p162 = scmp.ne.s32.totalorder %s151, %s152
      %p163 = scmp.eq.s32.totalorder %s27, 0
      %p164 = por %p162, %p163
      %p165 = scmp.ne.s32.totalorder %s151, %s152
      %p166 = scmp.eq.s32.totalorder %s28, 1
      %p167 = por %p165, %p166
      %p169 = scmp.ne.s32.totalorder %s152, %s168
      %p170 = scmp.eq.s32.totalorder %s28, 0
      %p171 = por %p169, %p170
      %s172 = ssub.s32 %s29, %s41
      %s173 = ssub.s32 %s30, %s37
      %s174 = sor.u32 %s172, %s173
      %p175 = scmp.eq.s32.totalorder %s174, 0
      %s177 = sadd.s32 %s176, 1
      %s178 = scalar_select %p175, %s176, %s177
      %p181 = pneg %p175
      %p182 = scmp.eq.s32.totalorder %s22, 1
      %p183 = por %p181, %p182
      %p184 = scmp.ne.s32.totalorder %s176, %s179
      %p185 = scmp.eq.s32.totalorder %s22, 0
      %p186 = por %p184, %p185
      %p187 = scmp.ne.s32.totalorder %s176, %s179
      %p188 = scmp.eq.s32.totalorder %s27, 1
      %p189 = por %p187, %p188
      %p190 = scmp.ne.s32.totalorder %s179, %s180
      %p191 = scmp.eq.s32.totalorder %s27, 0
      %p192 = por %p190, %p191
      %p193 = scmp.ne.s32.totalorder %s179, %s180
      %p194 = scmp.eq.s32.totalorder %s28, 1
      %p195 = por %p193, %p194
      %p197 = scmp.ne.s32.totalorder %s180, %s196
      %p198 = scmp.eq.s32.totalorder %s28, 0
      %p199 = por %p197, %p198
      %s200 = ssub.s32 %s29, %s41
      %s201 = ssub.s32 %s30, %s37
      %s202 = sor.u32 %s200, %s201
      %p203 = scmp.eq.s32.totalorder %s202, 0
      %s205 = sadd.s32 %s204, 1
      %s206 = scalar_select %p203, %s204, %s205
      %p209 = pneg %p203
      %p210 = scmp.eq.s32.totalorder %s22, 1
      %p211 = por %p209, %p210
      %p212 = scmp.ne.s32.totalorder %s204, %s207
      %p213 = scmp.eq.s32.totalorder %s22, 0
      %p214 = por %p212, %p213
      %p215 = scmp.ne.s32.totalorder %s204, %s207
      %p216 = scmp.eq.s32.totalorder %s27, 1
      %p217 = por %p215, %p216
      %p218 = scmp.ne.s32.totalorder %s207, %s208
      %p219 = scmp.eq.s32.totalorder %s27, 0
      %p220 = por %p218, %p219
      %p221 = scmp.ne.s32.totalorder %s207, %s208
      %p222 = scmp.eq.s32.totalorder %s28, 1
      %p223 = por %p221, %p222
      %p225 = scmp.ne.s32.totalorder %s208, %s224
      %p226 = scmp.eq.s32.totalorder %s28, 0
      %p227 = por %p225, %p226
      %p228 = scmp.le.s32.totalorder 1, %s22
      %p229 = scmp.lt.s32.totalorder %s22, 3
      %p230 = pnand %p228, %p229
      %p231 = pneg %p230
      // Predicated region
      $region9: #{tpu_custom_call.1} parent=5 // pred_check
        _
      $region10: #{tpu_custom_call.1} parent=5 // pred_check_branch
        %233 = sbr.rel (%p230) target = $region12
      $region11: #{tpu_custom_call.1} parent=5 // pred_region
        %s234 = ssub.s32 %s22, 1
        // Predicated region
        $region13: #{tpu_custom_call.1} parent=11 // pred_check
          %p235 = pneg %p60
        $region14: #{tpu_custom_call.1} parent=11 // pred_check_branch
          %237 = sbr.rel (%p235) target = $region16
        $region15: #{tpu_custom_call.1} parent=11 // pred_region
          %s239 = ssub.s32 512, 512
          %240 = vsyncadd [#allocation6], %s239
          %s241 = smul.addr %s31, 4
          %s242 = smul.addr %s241, 128
          %s243 = scalar_lea.hbm %s0, %s242
          %s245 = sshll.u32 [#allocation5], 4
          %s246 = int_to_ptr.vmem [resolvable:$true] %s245
          %248 = dma.hbm_to_vmem [thread:$0]  %s243, 512, %s246, [#allocation6]
        $region16: #{tpu_custom_call.1} parent=11 // pred_fallthru
          _
      $region12: #{tpu_custom_call.1} parent=5 // pred_fallthru
        _
      %p249 = scmp.lt.s32.totalorder %s22, 2
      // Predicated region
      $region17: #{tpu_custom_call.1} parent=5 // pred_check
        %p250 = pneg %p249
      $region18: #{tpu_custom_call.1} parent=5 // pred_check_branch
        %252 = sbr.rel (%p250) target = $region20
      $region19: #{tpu_custom_call.1} parent=5 // pred_region
        // Predicated region
        $region21: #{tpu_custom_call.1} parent=19 // pred_check
          %p253 = pneg %p80
        $region22: #{tpu_custom_call.1} parent=19 // pred_check_branch
          %255 = sbr.rel (%p253) target = $region24
        $region23: #{tpu_custom_call.1} parent=19 // pred_region
          %s256 = sand.u32 %s22, 1
          %s257 = scalar_lea.sflag [#allocation9], %s256
          %s258 = sand.u32 %s70, 1
          %s259 = smul.addr %s258, 128
          %s260 = scalar_lea.vmem [#allocation8], %s259
          %s261 = smul.u32 2, %s30
          %s263 = ssub.s32 2048, 2048
          %264 = vsyncadd %s257, %s263
          %s265 = smul.addr %s261, 128
          %s266 = scalar_lea.hbm %s1, %s265
          %s267 = sshll.u32 %s260, 4
          %s268 = int_to_ptr.vmem [resolvable:$true] %s267
          %273 = dma.hbm_to_vmem [thread:$0]  %s266, 2048, %s268, %s257, 512, 256, 16
        $region24: #{tpu_custom_call.1} parent=19 // pred_fallthru
          _
        // Predicated region
        $region25: #{tpu_custom_call.1} parent=19 // pred_check
          %p274 = pneg %p106
        $region26: #{tpu_custom_call.1} parent=19 // pred_check_branch
          %276 = sbr.rel (%p274) target = $region28
        $region27: #{tpu_custom_call.1} parent=19 // pred_region
          %s277 = sand.u32 %s22, 1
          %s278 = scalar_lea.sflag [#allocation9], %s277
          %s279 = sand.u32 %s96, 1
          %s280 = smul.addr %s279, 32
          %s281 = scalar_lea.vmem [#allocation10], %s280
          %s282 = smul.u32 2, %s30
          %s284 = ssub.s32 512, 512
          %285 = vsyncadd %s278, %s284
          %s286 = smul.addr %s282, 128
          %s287 = scalar_lea.hbm %s2, %s286
          %s288 = sshll.u32 %s281, 4
          %s289 = int_to_ptr.vmem [resolvable:$true] %s288
          %294 = dma.hbm_to_vmem [thread:$0]  %s287, 512, %s289, %s278, 512, 256, 16
        $region28: #{tpu_custom_call.1} parent=19 // pred_fallthru
          _
        // Predicated region
        $region29: #{tpu_custom_call.1} parent=19 // pred_check
          %p295 = pneg %p132
        $region30: #{tpu_custom_call.1} parent=19 // pred_check_branch
          %297 = sbr.rel (%p295) target = $region32
        $region31: #{tpu_custom_call.1} parent=19 // pred_region
          %s298 = sand.u32 %s22, 1
          %s299 = scalar_lea.sflag [#allocation12], %s298
          %s300 = sand.u32 %s122, 1
          %s301 = smul.addr %s300, 32
          %s302 = scalar_lea.vmem [#allocation11], %s301
          %s303 = smul.u32 2, %s30
          %s305 = ssub.s32 512, 512
          %306 = vsyncadd %s299, %s305
          %s307 = smul.addr %s303, 128
          %s308 = scalar_lea.hbm %s3, %s307
          %s309 = sshll.u32 %s302, 4
          %s310 = int_to_ptr.vmem [resolvable:$true] %s309
          %315 = dma.hbm_to_vmem [thread:$0]  %s308, 512, %s310, %s299, 512, 256, 16
        $region32: #{tpu_custom_call.1} parent=19 // pred_fallthru
          _
        // Predicated region
        $region33: #{tpu_custom_call.1} parent=19 // pred_check
          %p316 = pneg %p158
        $region34: #{tpu_custom_call.1} parent=19 // pred_check_branch
          %318 = sbr.rel (%p316) target = $region36
        $region35: #{tpu_custom_call.1} parent=19 // pred_region
          %s319 = smul.u32 2, %s30
          %p320 = scmp.lt.s32.totalorder %s319, 3
          %s321 = scalar_select %p320, %s319, 3
          %s322 = scalar_lea.vmem %s4, %s321
          %s323 = smul.u32 2, %s30
        $region36: #{tpu_custom_call.1} parent=19 // pred_fallthru
          _
        // Predicated region
        $region37: #{tpu_custom_call.1} parent=19 // pred_check
          %p324 = pneg %p186
        $region38: #{tpu_custom_call.1} parent=19 // pred_check_branch
          %326 = sbr.rel (%p324) target = $region40
        $region39: #{tpu_custom_call.1} parent=19 // pred_region
          %s327 = sand.u32 %s22, 1
          %s328 = scalar_lea.sflag [#allocation12], %s327
          %s329 = sand.u32 %s176, 1
          %s330 = smul.addr %s329, 16
          %s331 = scalar_lea.vmem [#allocation13], %s330
          %s332 = smul.u32 2, %s30
          %s334 = ssub.s32 256, 256
          %335 = vsyncadd %s328, %s334
          %s336 = smul.addr %s29, 4
          %s337 = sadd.s32 %s332, %s336
          %s338 = smul.addr %s337, 128
          %s339 = scalar_lea.hbm %s5, %s338
          %s341 = sshll.u32 %s331, 4
          %s342 = int_to_ptr.vmem [resolvable:$true] %s341
          %344 = dma.hbm_to_vmem [thread:$0]  %s339, 256, %s342, %s328
        $region40: #{tpu_custom_call.1} parent=19 // pred_fallthru
          _
      $region20: #{tpu_custom_call.1} parent=5 // pred_fallthru
        _
      %p345 = scmp.le.s32.totalorder 1, %s22
      %p346 = scmp.lt.s32.totalorder %s22, 3
      %p347 = pnand %p345, %p346
      %p348 = pneg %p347
      // Predicated region
      $region41: #{tpu_custom_call.1} parent=5 // pred_check
        _
      $region42: #{tpu_custom_call.1} parent=5 // pred_check_branch
        %350 = sbr.rel (%p347) target = $region44
      $region43: #{tpu_custom_call.1} parent=5 // pred_region
        %s351 = ssub.s32 %s22, 1
        // Predicated region
        $region45: #{tpu_custom_call.1} parent=43 // pred_check
          %p352 = pneg %p60
        $region46: #{tpu_custom_call.1} parent=43 // pred_check_branch
          %354 = sbr.rel (%p352) target = $region48
        $region47: #{tpu_custom_call.1} parent=43 // pred_region
          %355 = dma.done [#allocation6], 512
        $region48: #{tpu_custom_call.1} parent=43 // pred_fallthru
          _
        %s356 = sand.u32 %s27, 1
        %s357 = scalar_lea.sflag [#allocation9], %s356
        %s358 = sand.u32 %s73, 1
        %s359 = smul.addr %s358, 128
        %s360 = scalar_lea.vmem [#allocation8], %s359
        // Predicated region
        $region49: #{tpu_custom_call.1} parent=43 // pred_check
          %p361 = pneg %p86
        $region50: #{tpu_custom_call.1} parent=43 // pred_check_branch
          %363 = sbr.rel (%p361) target = $region52
        $region51: #{tpu_custom_call.1} parent=43 // pred_region
          %364 = dma.done %s357, 2048
        $region52: #{tpu_custom_call.1} parent=43 // pred_fallthru
          _
        %s365 = sand.u32 %s27, 1
        %s366 = scalar_lea.sflag [#allocation9], %s365
        %s367 = sand.u32 %s99, 1
        %s368 = smul.addr %s367, 32
        %s369 = scalar_lea.vmem [#allocation10], %s368
        // Predicated region
        $region53: #{tpu_custom_call.1} parent=43 // pred_check
          %p370 = pneg %p112
        $region54: #{tpu_custom_call.1} parent=43 // pred_check_branch
          %372 = sbr.rel (%p370) target = $region56
        $region55: #{tpu_custom_call.1} parent=43 // pred_region
          %373 = dma.done %s366, 512
        $region56: #{tpu_custom_call.1} parent=43 // pred_fallthru
          _
        %s374 = sand.u32 %s27, 1
        %s375 = scalar_lea.sflag [#allocation12], %s374
        %s376 = sand.u32 %s125, 1
        %s377 = smul.addr %s376, 32
        %s378 = scalar_lea.vmem [#allocation11], %s377
        // Predicated region
        $region57: #{tpu_custom_call.1} parent=43 // pred_check
          %p379 = pneg %p138
        $region58: #{tpu_custom_call.1} parent=43 // pred_check_branch
          %381 = sbr.rel (%p379) target = $region60
        $region59: #{tpu_custom_call.1} parent=43 // pred_region
          %382 = dma.done %s375, 512
        $region60: #{tpu_custom_call.1} parent=43 // pred_fallthru
          _
        %s383 = sand.u32 %s27, 1
        %s384 = scalar_lea.sflag [#allocation12], %s383
        %s385 = sand.u32 %s179, 1
        %s386 = smul.addr %s385, 16
        %s387 = scalar_lea.vmem [#allocation13], %s386
        // Predicated region
        $region61: #{tpu_custom_call.1} parent=43 // pred_check
          %p388 = pneg %p192
        $region62: #{tpu_custom_call.1} parent=43 // pred_check_branch
          %390 = sbr.rel (%p388) target = $region64
        $region63: #{tpu_custom_call.1} parent=43 // pred_region
          %391 = dma.done %s384, 256
        $region64: #{tpu_custom_call.1} parent=43 // pred_fallthru
          _
        %p392 = pneg %p60
        %p393 = pneg %p57
        %s394 = sand.u32 %s27, 1
        %s395 = scalar_lea.sflag [#allocation9], %s394
        %s396 = sand.u32 %s73, 1
        %s397 = smul.addr %s396, 128
        %s398 = scalar_lea.vmem [#allocation8], %s397
        %p399 = pneg %p86
        %p400 = pneg %p83
        %s401 = sand.u32 %s27, 1
        %s402 = scalar_lea.sflag [#allocation9], %s401
        %s403 = sand.u32 %s99, 1
        %s404 = smul.addr %s403, 32
        %s405 = scalar_lea.vmem [#allocation10], %s404
        %p406 = pneg %p112
        %p407 = pneg %p109
        %s408 = sand.u32 %s27, 1
        %s409 = scalar_lea.sflag [#allocation12], %s408
        %s410 = sand.u32 %s125, 1
        %s411 = smul.addr %s410, 32
        %s412 = scalar_lea.vmem [#allocation11], %s411
        %p413 = pneg %p138
        %p414 = pneg %p135
        %s415 = smul.u32 2, %s32
        %p416 = scmp.lt.s32.totalorder %s415, 3
        %s417 = scalar_select %p416, %s415, 3
        %s418 = scalar_lea.vmem %s4, %s417
        %p419 = pneg %p164
        %p420 = pneg %p161
        %s421 = sand.u32 %s27, 1
        %s422 = scalar_lea.sflag [#allocation12], %s421
        %s423 = sand.u32 %s179, 1
        %s424 = smul.addr %s423, 16
        %s425 = scalar_lea.vmem [#allocation13], %s424
        %p426 = pneg %p192
        %p427 = pneg %p189
        %p428 = pneg %p220
        %p429 = pneg %p217
        %s430 = sand.u32 %s207, 1
        %s431 = scalar_lea.sflag [#allocation7], %s430
        %s432 = sand.u32 %s207, 1
        %s433 = smul.addr %s432, 16
        %s434 = scalar_lea.vmem [#allocation14], %s433
        %s435 = smul.u32 2, %s32
        %s436 = smul.u32 2, %s32
        %s437 = smul.u32 2, %s32
        %s438 = smul.u32 2, %s32
        %p439 = scmp.lt.s32.totalorder %s438, 3
        %s440 = scalar_select %p439, %s438, 3
        %s441 = scalar_lea.vmem %s4, %s440
        %s442 = smul.u32 2, %s32
        %s443 = smul.u32 2, %s32
        %s444 = smul.u32 2, %s32
        %p446 = scmp.eq.s32.totalorder %s32, 0
        // Predicated region
        $region65: #{tpu_custom_call.1} parent=43 // pred_check
          %p447 = pneg %p446
        $region66: #{tpu_custom_call.1} parent=43 // pred_check_branch
          %449 = sbr.rel (%p447) target = $region68
        $region67: #{tpu_custom_call.1} parent=43 // pred_region
          %v450 = vld [vmem:[#allocation5] sm:$0xff]
          %v451 = vld [vmem:[#allocation5 + $0x8] sm:$0xff]
          %v452 = vld [vmem:[#allocation5 + $0x10] sm:$0xff]
          %v453 = vld [vmem:[#allocation5 + $0x18] sm:$0xff]
          %v454 = vpack.c.bf16 %v450, %v450
          %v455 = vpack.c.bf16 %v451, %v451
          %v456 = vpack.c.bf16 %v452, %v452
          %v457 = vpack.c.bf16 %v453, %v453
          %v462 = vunpack.c.l.b16 %v454
          %v463 = vunpack.c.l.b16 %v455
          %v464 = vunpack.c.l.b16 %v456
          %v465 = vunpack.c.l.b16 %v457
          %v466 = vpack.c.b16 %v463, %v462
          %v467 = vpack.c.b16 %v465, %v464
          %470 = vst [vmem:[#allocation2] sm:$0xff] %v466
          %471 = vst [vmem:[#allocation2 + $0x8] sm:$0xff] %v467
          %v472 = vlaneseq
          %v473 = vshrl.u32 %v472, 7
          %v474 = vadd.s32 %v473, 8
          %v475 = vadd.s32 %v473, 16
          %v476 = vadd.s32 %v473, 24
          %v477 = vadd.s32 %v473, 32
          %v478 = vadd.s32 %v473, 40
          %v479 = vadd.s32 %v473, 48
          %v480 = vadd.s32 %v473, 56
          %v481 = vadd.s32 %v473, 64
          %v482 = vadd.s32 %v473, 72
          %v483 = vadd.s32 %v473, 80
          %v484 = vadd.s32 %v473, 88
          %v485 = vadd.s32 %v473, 96
          %v486 = vadd.s32 %v473, 104
          %v487 = vadd.s32 %v473, 112
          %v488 = vadd.s32 %v473, 120
          %v489 = vadd.s32 %v473, 128
          %v490 = vadd.s32 %v473, 136
          %v491 = vadd.s32 %v473, 144
          %v492 = vadd.s32 %v473, 152
          %v493 = vadd.s32 %v473, 160
          %v494 = vadd.s32 %v473, 168
          %v495 = vadd.s32 %v473, 176
          %v496 = vadd.s32 %v473, 184
          %v497 = vadd.s32 %v473, 192
          %v498 = vadd.s32 %v473, 200
          %v499 = vadd.s32 %v473, 208
          %v500 = vadd.s32 %v473, 216
          %v501 = vadd.s32 %v473, 224
          %v502 = vadd.s32 %v473, 232
          %v503 = vadd.s32 %v473, 240
          %v504 = vadd.s32 %v473, 248
          %v505 = vadd.s32 %v473, 256
          %v506 = vadd.s32 %v473, 264
          %v507 = vadd.s32 %v473, 272
          %v508 = vadd.s32 %v473, 280
          %v509 = vadd.s32 %v473, 288
          %v510 = vadd.s32 %v473, 296
          %v511 = vadd.s32 %v473, 304
          %v512 = vadd.s32 %v473, 312
          %v513 = vadd.s32 %v473, 320
          %v514 = vadd.s32 %v473, 328
          %v515 = vadd.s32 %v473, 336
          %v516 = vadd.s32 %v473, 344
          %v517 = vadd.s32 %v473, 352
          %v518 = vadd.s32 %v473, 360
          %v519 = vadd.s32 %v473, 368
          %v520 = vadd.s32 %v473, 376
          %v521 = vadd.s32 %v473, 384
          %v522 = vadd.s32 %v473, 392
          %v523 = vadd.s32 %v473, 400
          %v524 = vadd.s32 %v473, 408
          %v525 = vadd.s32 %v473, 416
          %v526 = vadd.s32 %v473, 424
          %v527 = vadd.s32 %v473, 432
          %v528 = vadd.s32 %v473, 440
          %v529 = vadd.s32 %v473, 448
          %v530 = vadd.s32 %v473, 456
          %v531 = vadd.s32 %v473, 464
          %v532 = vadd.s32 %v473, 472
          %v533 = vadd.s32 %v473, 480
          %v534 = vadd.s32 %v473, 488
          %v535 = vadd.s32 %v473, 496
          %v536 = vadd.s32 %v473, 504
          %v537 = vlaneseq
          %v538 = vand.u32 %v537, 127
          %v539 = vmul.u32 %v538, 32
          %v540 = vsub.s32 %v473, %v539
          %v541 = vsub.s32 %v474, %v539
          %v542 = vsub.s32 %v475, %v539
          %v543 = vsub.s32 %v476, %v539
          %v544 = vsub.s32 %v477, %v539
          %v545 = vsub.s32 %v478, %v539
          %v546 = vsub.s32 %v479, %v539
          %v547 = vsub.s32 %v480, %v539
          %v548 = vsub.s32 %v481, %v539
          %v549 = vsub.s32 %v482, %v539
          %v550 = vsub.s32 %v483, %v539
          %v551 = vsub.s32 %v484, %v539
          %v552 = vsub.s32 %v485, %v539
          %v553 = vsub.s32 %v486, %v539
          %v554 = vsub.s32 %v487, %v539
          %v555 = vsub.s32 %v488, %v539
          %v556 = vsub.s32 %v489, %v539
          %v557 = vsub.s32 %v490, %v539
          %v558 = vsub.s32 %v491, %v539
          %v559 = vsub.s32 %v492, %v539
          %v560 = vsub.s32 %v493, %v539
          %v561 = vsub.s32 %v494, %v539
          %v562 = vsub.s32 %v495, %v539
          %v563 = vsub.s32 %v496, %v539
          %v564 = vsub.s32 %v497, %v539
          %v565 = vsub.s32 %v498, %v539
          %v566 = vsub.s32 %v499, %v539
          %v567 = vsub.s32 %v500, %v539
          %v568 = vsub.s32 %v501, %v539
          %v569 = vsub.s32 %v502, %v539
          %v570 = vsub.s32 %v503, %v539
          %v571 = vsub.s32 %v504, %v539
          %v572 = vsub.s32 %v505, %v539
          %v573 = vsub.s32 %v506, %v539
          %v574 = vsub.s32 %v507, %v539
          %v575 = vsub.s32 %v508, %v539
          %v576 = vsub.s32 %v509, %v539
          %v577 = vsub.s32 %v510, %v539
          %v578 = vsub.s32 %v511, %v539
          %v579 = vsub.s32 %v512, %v539
          %v580 = vsub.s32 %v513, %v539
          %v581 = vsub.s32 %v514, %v539
          %v582 = vsub.s32 %v515, %v539
          %v583 = vsub.s32 %v516, %v539
          %v584 = vsub.s32 %v517, %v539
          %v585 = vsub.s32 %v518, %v539
          %v586 = vsub.s32 %v519, %v539
          %v587 = vsub.s32 %v520, %v539
          %v588 = vsub.s32 %v521, %v539
          %v589 = vsub.s32 %v522, %v539
          %v590 = vsub.s32 %v523, %v539
          %v591 = vsub.s32 %v524, %v539
          %v592 = vsub.s32 %v525, %v539
          %v593 = vsub.s32 %v526, %v539
          %v594 = vsub.s32 %v527, %v539
          %v595 = vsub.s32 %v528, %v539
          %v596 = vsub.s32 %v529, %v539
          %v597 = vsub.s32 %v530, %v539
          %v598 = vsub.s32 %v531, %v539
          %v599 = vsub.s32 %v532, %v539
          %v600 = vsub.s32 %v533, %v539
          %v601 = vsub.s32 %v534, %v539
          %v602 = vsub.s32 %v535, %v539
          %v603 = vsub.s32 %v536, %v539
          %vm604 = vcmp.ge.s32.totalorder %v540, 0
          %vm605 = vcmp.ge.s32.totalorder %v541, 0
          %vm606 = vcmp.ge.s32.totalorder %v542, 0
          %vm607 = vcmp.ge.s32.totalorder %v543, 0
          %vm608 = vcmp.ge.s32.totalorder %v544, 0
          %vm609 = vcmp.ge.s32.totalorder %v545, 0
          %vm610 = vcmp.ge.s32.totalorder %v546, 0
          %vm611 = vcmp.ge.s32.totalorder %v547, 0
          %vm612 = vcmp.ge.s32.totalorder %v548, 0
          %vm613 = vcmp.ge.s32.totalorder %v549, 0
          %vm614 = vcmp.ge.s32.totalorder %v550, 0
          %vm615 = vcmp.ge.s32.totalorder %v551, 0
          %vm616 = vcmp.ge.s32.totalorder %v552, 0
          %vm617 = vcmp.ge.s32.totalorder %v553, 0
          %vm618 = vcmp.ge.s32.totalorder %v554, 0
          %vm619 = vcmp.ge.s32.totalorder %v555, 0
          %vm620 = vcmp.ge.s32.totalorder %v556, 0
          %vm621 = vcmp.ge.s32.totalorder %v557, 0
          %vm622 = vcmp.ge.s32.totalorder %v558, 0
          %vm623 = vcmp.ge.s32.totalorder %v559, 0
          %vm624 = vcmp.ge.s32.totalorder %v560, 0
          %vm625 = vcmp.ge.s32.totalorder %v561, 0
          %vm626 = vcmp.ge.s32.totalorder %v562, 0
          %vm627 = vcmp.ge.s32.totalorder %v563, 0
          %vm628 = vcmp.ge.s32.totalorder %v564, 0
          %vm629 = vcmp.ge.s32.totalorder %v565, 0
          %vm630 = vcmp.ge.s32.totalorder %v566, 0
          %vm631 = vcmp.ge.s32.totalorder %v567, 0
          %vm632 = vcmp.ge.s32.totalorder %v568, 0
          %vm633 = vcmp.ge.s32.totalorder %v569, 0
          %vm634 = vcmp.ge.s32.totalorder %v570, 0
          %vm635 = vcmp.ge.s32.totalorder %v571, 0
          %vm636 = vcmp.ge.s32.totalorder %v572, 0
          %vm637 = vcmp.ge.s32.totalorder %v573, 0
          %vm638 = vcmp.ge.s32.totalorder %v574, 0
          %vm639 = vcmp.ge.s32.totalorder %v575, 0
          %vm640 = vcmp.ge.s32.totalorder %v576, 0
          %vm641 = vcmp.ge.s32.totalorder %v577, 0
          %vm642 = vcmp.ge.s32.totalorder %v578, 0
          %vm643 = vcmp.ge.s32.totalorder %v579, 0
          %vm644 = vcmp.ge.s32.totalorder %v580, 0
          %vm645 = vcmp.ge.s32.totalorder %v581, 0
          %vm646 = vcmp.ge.s32.totalorder %v582, 0
          %vm647 = vcmp.ge.s32.totalorder %v583, 0
          %vm648 = vcmp.ge.s32.totalorder %v584, 0
          %vm649 = vcmp.ge.s32.totalorder %v585, 0
          %vm650 = vcmp.ge.s32.totalorder %v586, 0
          %vm651 = vcmp.ge.s32.totalorder %v587, 0
          %vm652 = vcmp.ge.s32.totalorder %v588, 0
          %vm653 = vcmp.ge.s32.totalorder %v589, 0
          %vm654 = vcmp.ge.s32.totalorder %v590, 0
          %vm655 = vcmp.ge.s32.totalorder %v591, 0
          %vm656 = vcmp.ge.s32.totalorder %v592, 0
          %vm657 = vcmp.ge.s32.totalorder %v593, 0
          %vm658 = vcmp.ge.s32.totalorder %v594, 0
          %vm659 = vcmp.ge.s32.totalorder %v595, 0
          %vm660 = vcmp.ge.s32.totalorder %v596, 0
          %vm661 = vcmp.ge.s32.totalorder %v597, 0
          %vm662 = vcmp.ge.s32.totalorder %v598, 0
          %vm663 = vcmp.ge.s32.totalorder %v599, 0
          %vm664 = vcmp.ge.s32.totalorder %v600, 0
          %vm665 = vcmp.ge.s32.totalorder %v601, 0
          %vm666 = vcmp.ge.s32.totalorder %v602, 0
          %vm667 = vcmp.ge.s32.totalorder %v603, 0
          %vm668 = vcmp.lt.s32.totalorder %v540, 32
          %vm669 = vcmp.lt.s32.totalorder %v541, 32
          %vm670 = vcmp.lt.s32.totalorder %v542, 32
          %vm671 = vcmp.lt.s32.totalorder %v543, 32
          %vm672 = vcmp.lt.s32.totalorder %v544, 32
          %vm673 = vcmp.lt.s32.totalorder %v545, 32
          %vm674 = vcmp.lt.s32.totalorder %v546, 32
          %vm675 = vcmp.lt.s32.totalorder %v547, 32
          %vm676 = vcmp.lt.s32.totalorder %v548, 32
          %vm677 = vcmp.lt.s32.totalorder %v549, 32
          %vm678 = vcmp.lt.s32.totalorder %v550, 32
          %vm679 = vcmp.lt.s32.totalorder %v551, 32
          %vm680 = vcmp.lt.s32.totalorder %v552, 32
          %vm681 = vcmp.lt.s32.totalorder %v553, 32
          %vm682 = vcmp.lt.s32.totalorder %v554, 32
          %vm683 = vcmp.lt.s32.totalorder %v555, 32
          %vm684 = vcmp.lt.s32.totalorder %v556, 32
          %vm685 = vcmp.lt.s32.totalorder %v557, 32
          %vm686 = vcmp.lt.s32.totalorder %v558, 32
          %vm687 = vcmp.lt.s32.totalorder %v559, 32
          %vm688 = vcmp.lt.s32.totalorder %v560, 32
          %vm689 = vcmp.lt.s32.totalorder %v561, 32
          %vm690 = vcmp.lt.s32.totalorder %v562, 32
          %vm691 = vcmp.lt.s32.totalorder %v563, 32
          %vm692 = vcmp.lt.s32.totalorder %v564, 32
          %vm693 = vcmp.lt.s32.totalorder %v565, 32
          %vm694 = vcmp.lt.s32.totalorder %v566, 32
          %vm695 = vcmp.lt.s32.totalorder %v567, 32
          %vm696 = vcmp.lt.s32.totalorder %v568, 32
          %vm697 = vcmp.lt.s32.totalorder %v569, 32
          %vm698 = vcmp.lt.s32.totalorder %v570, 32
          %vm699 = vcmp.lt.s32.totalorder %v571, 32
          %vm700 = vcmp.lt.s32.totalorder %v572, 32
          %vm701 = vcmp.lt.s32.totalorder %v573, 32
          %vm702 = vcmp.lt.s32.totalorder %v574, 32
          %vm703 = vcmp.lt.s32.totalorder %v575, 32
          %vm704 = vcmp.lt.s32.totalorder %v576, 32
          %vm705 = vcmp.lt.s32.totalorder %v577, 32
          %vm706 = vcmp.lt.s32.totalorder %v578, 32
          %vm707 = vcmp.lt.s32.totalorder %v579, 32
          %vm708 = vcmp.lt.s32.totalorder %v580, 32
          %vm709 = vcmp.lt.s32.totalorder %v581, 32
          %vm710 = vcmp.lt.s32.totalorder %v582, 32
          %vm711 = vcmp.lt.s32.totalorder %v583, 32
          %vm712 = vcmp.lt.s32.totalorder %v584, 32
          %vm713 = vcmp.lt.s32.totalorder %v585, 32
          %vm714 = vcmp.lt.s32.totalorder %v586, 32
          %vm715 = vcmp.lt.s32.totalorder %v587, 32
          %vm716 = vcmp.lt.s32.totalorder %v588, 32
          %vm717 = vcmp.lt.s32.totalorder %v589, 32
          %vm718 = vcmp.lt.s32.totalorder %v590, 32
          %vm719 = vcmp.lt.s32.totalorder %v591, 32
          %vm720 = vcmp.lt.s32.totalorder %v592, 32
          %vm721 = vcmp.lt.s32.totalorder %v593, 32
          %vm722 = vcmp.lt.s32.totalorder %v594, 32
          %vm723 = vcmp.lt.s32.totalorder %v595, 32
          %vm724 = vcmp.lt.s32.totalorder %v596, 32
          %vm725 = vcmp.lt.s32.totalorder %v597, 32
          %vm726 = vcmp.lt.s32.totalorder %v598, 32
          %vm727 = vcmp.lt.s32.totalorder %v599, 32
          %vm728 = vcmp.lt.s32.totalorder %v600, 32
          %vm729 = vcmp.lt.s32.totalorder %v601, 32
          %vm730 = vcmp.lt.s32.totalorder %v602, 32
          %vm731 = vcmp.lt.s32.totalorder %v603, 32
          %vm732 = vmand %vm604, %vm668
          %vm733 = vmand %vm605, %vm669
          %vm734 = vmand %vm606, %vm670
          %vm735 = vmand %vm607, %vm671
          %vm736 = vmand %vm608, %vm672
          %vm737 = vmand %vm609, %vm673
          %vm738 = vmand %vm610, %vm674
          %vm739 = vmand %vm611, %vm675
          %vm740 = vmand %vm612, %vm676
          %vm741 = vmand %vm613, %vm677
          %vm742 = vmand %vm614, %vm678
          %vm743 = vmand %vm615, %vm679
          %vm744 = vmand %vm616, %vm680
          %vm745 = vmand %vm617, %vm681
          %vm746 = vmand %vm618, %vm682
          %vm747 = vmand %vm619, %vm683
          %vm748 = vmand %vm620, %vm684
          %vm749 = vmand %vm621, %vm685
          %vm750 = vmand %vm622, %vm686
          %vm751 = vmand %vm623, %vm687
          %vm752 = vmand %vm624, %vm688
          %vm753 = vmand %vm625, %vm689
          %vm754 = vmand %vm626, %vm690
          %vm755 = vmand %vm627, %vm691
          %vm756 = vmand %vm628, %vm692
          %vm757 = vmand %vm629, %vm693
          %vm758 = vmand %vm630, %vm694
          %vm759 = vmand %vm631, %vm695
          %vm760 = vmand %vm632, %vm696
          %vm761 = vmand %vm633, %vm697
          %vm762 = vmand %vm634, %vm698
          %vm763 = vmand %vm635, %vm699
          %vm764 = vmand %vm636, %vm700
          %vm765 = vmand %vm637, %vm701
          %vm766 = vmand %vm638, %vm702
          %vm767 = vmand %vm639, %vm703
          %vm768 = vmand %vm640, %vm704
          %vm769 = vmand %vm641, %vm705
          %vm770 = vmand %vm642, %vm706
          %vm771 = vmand %vm643, %vm707
          %vm772 = vmand %vm644, %vm708
          %vm773 = vmand %vm645, %vm709
          %vm774 = vmand %vm646, %vm710
          %vm775 = vmand %vm647, %vm711
          %vm776 = vmand %vm648, %vm712
          %vm777 = vmand %vm649, %vm713
          %vm778 = vmand %vm650, %vm714
          %vm779 = vmand %vm651, %vm715
          %vm780 = vmand %vm652, %vm716
          %vm781 = vmand %vm653, %vm717
          %vm782 = vmand %vm654, %vm718
          %vm783 = vmand %vm655, %vm719
          %vm784 = vmand %vm656, %vm720
          %vm785 = vmand %vm657, %vm721
          %vm786 = vmand %vm658, %vm722
          %vm787 = vmand %vm659, %vm723
          %vm788 = vmand %vm660, %vm724
          %vm789 = vmand %vm661, %vm725
          %vm790 = vmand %vm662, %vm726
          %vm791 = vmand %vm663, %vm727
          %vm792 = vmand %vm664, %vm728
          %vm793 = vmand %vm665, %vm729
          %vm794 = vmand %vm666, %vm730
          %vm795 = vmand %vm667, %vm731
          %v796 = vsel %vm732, 1.0, 0.0
          %v797 = vsel %vm733, 1.0, 0.0
          %v798 = vsel %vm734, 1.0, 0.0
          %v799 = vsel %vm735, 1.0, 0.0
          %v800 = vsel %vm736, 1.0, 0.0
          %v801 = vsel %vm737, 1.0, 0.0
          %v802 = vsel %vm738, 1.0, 0.0
          %v803 = vsel %vm739, 1.0, 0.0
          %v804 = vsel %vm740, 1.0, 0.0
          %v805 = vsel %vm741, 1.0, 0.0
          %v806 = vsel %vm742, 1.0, 0.0
          %v807 = vsel %vm743, 1.0, 0.0
          %v808 = vsel %vm744, 1.0, 0.0
          %v809 = vsel %vm745, 1.0, 0.0
          %v810 = vsel %vm746, 1.0, 0.0
          %v811 = vsel %vm747, 1.0, 0.0
          %v812 = vsel %vm748, 1.0, 0.0
          %v813 = vsel %vm749, 1.0, 0.0
          %v814 = vsel %vm750, 1.0, 0.0
          %v815 = vsel %vm751, 1.0, 0.0
          %v816 = vsel %vm752, 1.0, 0.0
          %v817 = vsel %vm753, 1.0, 0.0
          %v818 = vsel %vm754, 1.0, 0.0
          %v819 = vsel %vm755, 1.0, 0.0
          %v820 = vsel %vm756, 1.0, 0.0
          %v821 = vsel %vm757, 1.0, 0.0
          %v822 = vsel %vm758, 1.0, 0.0
          %v823 = vsel %vm759, 1.0, 0.0
          %v824 = vsel %vm760, 1.0, 0.0
          %v825 = vsel %vm761, 1.0, 0.0
          %v826 = vsel %vm762, 1.0, 0.0
          %v827 = vsel %vm763, 1.0, 0.0
          %v828 = vsel %vm764, 1.0, 0.0
          %v829 = vsel %vm765, 1.0, 0.0
          %v830 = vsel %vm766, 1.0, 0.0
          %v831 = vsel %vm767, 1.0, 0.0
          %v832 = vsel %vm768, 1.0, 0.0
          %v833 = vsel %vm769, 1.0, 0.0
          %v834 = vsel %vm770, 1.0, 0.0
          %v835 = vsel %vm771, 1.0, 0.0
          %v836 = vsel %vm772, 1.0, 0.0
          %v837 = vsel %vm773, 1.0, 0.0
          %v838 = vsel %vm774, 1.0, 0.0
          %v839 = vsel %vm775, 1.0, 0.0
          %v840 = vsel %vm776, 1.0, 0.0
          %v841 = vsel %vm777, 1.0, 0.0
          %v842 = vsel %vm778, 1.0, 0.0
          %v843 = vsel %vm779, 1.0, 0.0
          %v844 = vsel %vm780, 1.0, 0.0
          %v845 = vsel %vm781, 1.0, 0.0
          %v846 = vsel %vm782, 1.0, 0.0
          %v847 = vsel %vm783, 1.0, 0.0
          %v848 = vsel %vm784, 1.0, 0.0
          %v849 = vsel %vm785, 1.0, 0.0
          %v850 = vsel %vm786, 1.0, 0.0
          %v851 = vsel %vm787, 1.0, 0.0
          %v852 = vsel %vm788, 1.0, 0.0
          %v853 = vsel %vm789, 1.0, 0.0
          %v854 = vsel %vm790, 1.0, 0.0
          %v855 = vsel %vm791, 1.0, 0.0
          %v856 = vsel %vm792, 1.0, 0.0
          %v857 = vsel %vm793, 1.0, 0.0
          %v858 = vsel %vm794, 1.0, 0.0
          %v859 = vsel %vm795, 1.0, 0.0
          %v860 = vpack.c.bf16 %v797, %v796
          %v861 = vpack.c.bf16 %v799, %v798
          %v862 = vpack.c.bf16 %v801, %v800
          %v863 = vpack.c.bf16 %v803, %v802
          %v864 = vpack.c.bf16 %v805, %v804
          %v865 = vpack.c.bf16 %v807, %v806
          %v866 = vpack.c.bf16 %v809, %v808
          %v867 = vpack.c.bf16 %v811, %v810
          %v868 = vpack.c.bf16 %v813, %v812
          %v869 = vpack.c.bf16 %v815, %v814
          %v870 = vpack.c.bf16 %v817, %v816
          %v871 = vpack.c.bf16 %v819, %v818
          %v872 = vpack.c.bf16 %v821, %v820
          %v873 = vpack.c.bf16 %v823, %v822
          %v874 = vpack.c.bf16 %v825, %v824
          %v875 = vpack.c.bf16 %v827, %v826
          %v876 = vpack.c.bf16 %v829, %v828
          %v877 = vpack.c.bf16 %v831, %v830
          %v878 = vpack.c.bf16 %v833, %v832
          %v879 = vpack.c.bf16 %v835, %v834
          %v880 = vpack.c.bf16 %v837, %v836
          %v881 = vpack.c.bf16 %v839, %v838
          %v882 = vpack.c.bf16 %v841, %v840
          %v883 = vpack.c.bf16 %v843, %v842
          %v884 = vpack.c.bf16 %v845, %v844
          %v885 = vpack.c.bf16 %v847, %v846
          %v886 = vpack.c.bf16 %v849, %v848
          %v887 = vpack.c.bf16 %v851, %v850
          %v888 = vpack.c.bf16 %v853, %v852
          %v889 = vpack.c.bf16 %v855, %v854
          %v890 = vpack.c.bf16 %v857, %v856
          %v891 = vpack.c.bf16 %v859, %v858
          %v892 = vld [vmem:[#allocation2] sm:$0xff]
          %v893 = vld [vmem:[#allocation2 + $0x8] sm:$0xff]
          %v896 = vunpack.c.l.b16 %v892
          %v897 = vunpack.c.h.b16 %v892
          %v898 = vunpack.c.l.b16 %v893
          %v899 = vunpack.c.h.b16 %v893
          %v900 = vpack.c.b16 %v896, %v896
          %v901 = vpack.c.b16 %v897, %v897
          %v902 = vpack.c.b16 %v898, %v898
          %v903 = vpack.c.b16 %v899, %v899
          %908 = vmatprep.subr.bf16.mxu0 0
          %909 = vmatpush1.bf16.msra.mxu0 %v867
          %910 = vmatprep.subr.bf16.mxu0 0
          %911 = vmatpush1.bf16.msra.mxu0 %v866
          %912 = vmatprep.subr.bf16.mxu0 0
          %913 = vmatpush1.bf16.msra.mxu0 %v865
          %914 = vmatprep.subr.bf16.mxu0 0
          %915 = vmatpush1.bf16.msra.mxu0 %v864
          %916 = vmatprep.subr.bf16.mxu0 0
          %917 = vmatpush1.bf16.msra.mxu0 %v863
          %918 = vmatprep.subr.bf16.mxu0 0
          %919 = vmatpush1.bf16.msra.mxu0 %v862
          %920 = vmatprep.subr.bf16.mxu0 0
          %921 = vmatpush1.bf16.msra.mxu0 %v861
          %922 = vmatprep.subr.bf16.mxu0 0
          %923 = vmatpush1.bf16.msra.mxu0 %v860
          %924 = vmatprep.subr.bf16.mxu0 0
          %925 = vmatpush2.bf16.msra.mxu0 %v875
          %926 = vmatprep.subr.bf16.mxu0 0
          %927 = vmatpush2.bf16.msra.mxu0 %v874
          %928 = vmatprep.subr.bf16.mxu0 0
          %929 = vmatpush2.bf16.msra.mxu0 %v873
          %930 = vmatprep.subr.bf16.mxu0 0
          %931 = vmatpush2.bf16.msra.mxu0 %v872
          %932 = vmatprep.subr.bf16.mxu0 0
          %933 = vmatpush2.bf16.msra.mxu0 %v871
          %934 = vmatprep.subr.bf16.mxu0 0
          %935 = vmatpush2.bf16.msra.mxu0 %v870
          %936 = vmatprep.subr.bf16.mxu0 0
          %937 = vmatpush2.bf16.msra.mxu0 %v869
          %938 = vmatprep.subr.bf16.mxu0 0
          %939 = vmatpush2.bf16.msra.mxu0 %v868
          %940 = vmatprep.mubr.bf16.mxu0 %v901
          %941 = vmatmul.mubr.bf16.gmra.mxu0 %v900
          %v942 = vpop.f32.mrf.mxu0
          %v943 = vadd.f32 0.0, %v942
          %v944 = vpop.f32.mrf.mxu0
          %v945 = vpop.f32.mrf.mxu0
          %v946 = vpop.f32.mrf.mxu0
          %947 = vdwg.mxu0
          %948 = vmatprep.subr.bf16.mxu0 0
          %949 = vmatpush1.bf16.msra.mxu0 %v883
          %950 = vmatprep.subr.bf16.mxu0 0
          %951 = vmatpush1.bf16.msra.mxu0 %v882
          %952 = vmatprep.subr.bf16.mxu0 0
          %953 = vmatpush1.bf16.msra.mxu0 %v881
          %954 = vmatprep.subr.bf16.mxu0 0
          %955 = vmatpush1.bf16.msra.mxu0 %v880
          %956 = vmatprep.subr.bf16.mxu0 0
          %957 = vmatpush1.bf16.msra.mxu0 %v879
          %958 = vmatprep.subr.bf16.mxu0 0
          %959 = vmatpush1.bf16.msra.mxu0 %v878
          %960 = vmatprep.subr.bf16.mxu0 0
          %961 = vmatpush1.bf16.msra.mxu0 %v877
          %962 = vmatprep.subr.bf16.mxu0 0
          %963 = vmatpush1.bf16.msra.mxu0 %v876
          %964 = vmatprep.subr.bf16.mxu0 0
          %965 = vmatpush2.bf16.msra.mxu0 %v891
          %966 = vmatprep.subr.bf16.mxu0 0
          %967 = vmatpush2.bf16.msra.mxu0 %v890
          %968 = vmatprep.subr.bf16.mxu0 0
          %969 = vmatpush2.bf16.msra.mxu0 %v889
          %970 = vmatprep.subr.bf16.mxu0 0
          %971 = vmatpush2.bf16.msra.mxu0 %v888
          %972 = vmatprep.subr.bf16.mxu0 0
          %973 = vmatpush2.bf16.msra.mxu0 %v887
          %974 = vmatprep.subr.bf16.mxu0 0
          %975 = vmatpush2.bf16.msra.mxu0 %v886
          %976 = vmatprep.subr.bf16.mxu0 0
          %977 = vmatpush2.bf16.msra.mxu0 %v885
          %978 = vmatprep.subr.bf16.mxu0 0
          %979 = vmatpush2.bf16.msra.mxu0 %v884
          %980 = vmatprep.mubr.bf16.mxu0 %v903
          %981 = vmatmul.mubr.bf16.gmra.mxu0 %v902
          %v982 = vpop.f32.mrf.mxu0
          %v983 = vadd.f32 %v943, %v982
          %v984 = vpop.f32.mrf.mxu0
          %v985 = vpop.f32.mrf.mxu0
          %v986 = vpop.f32.mrf.mxu0
          %987 = vdwg.mxu0
          %vm988 = vcmask 130048
          %989 = vst.msk [vmem:[#allocation3] sm:$0xff] %vm988, %v983
        $region68: #{tpu_custom_call.1} parent=43 // pred_fallthru
          _
        %v990 = vld [vmem:[%s360] sm:$0xff]
        %v991 = vld [vmem:[%s360 + $0x8] sm:$0xff]
        %v992 = vld [vmem:[%s360 + $0x10] sm:$0xff]
        %v993 = vld [vmem:[%s360 + $0x18] sm:$0xff]
        %v994 = vld [vmem:[%s360 + $0x20] sm:$0xff]
        %v995 = vld [vmem:[%s360 + $0x28] sm:$0xff]
        %v996 = vld [vmem:[%s360 + $0x30] sm:$0xff]
        %v997 = vld [vmem:[%s360 + $0x38] sm:$0xff]
        %v998 = vand.u32 %v990, 15
        %v999 = vand.u32 %v991, 15
        %v1000 = vand.u32 %v992, 15
        %v1001 = vand.u32 %v993, 15
        %v1002 = vand.u32 %v994, 15
        %v1003 = vand.u32 %v995, 15
        %v1004 = vand.u32 %v996, 15
        %v1005 = vand.u32 %v997, 15
        %v1006 = vcvt.s32.f32 %v998
        %v1007 = vcvt.s32.f32 %v999
        %v1008 = vcvt.s32.f32 %v1000
        %v1009 = vcvt.s32.f32 %v1001
        %v1010 = vcvt.s32.f32 %v1002
        %v1011 = vcvt.s32.f32 %v1003
        %v1012 = vcvt.s32.f32 %v1004
        %v1013 = vcvt.s32.f32 %v1005
        %v1014 = vld [vmem:[%s369] ss:$8 sm:$0x3]
        %v1016 = vlaneseq
        %v1017 = vshrl.u32 %v1016, 7
        %v1018 = vsub.s32 0, %v1017
        %v1019 = vrot.slane %v1014, %v1018
        %v1020 = vlaneseq
        %v1021 = vshrl.u32 %v1020, 7
        %v1022 = vsub.s32 1, %v1021
        %v1023 = vrot.slane %v1014, %v1022
        %v1026 = vmul.f32 %v1006, %v1019
        %v1027 = vmul.f32 %v1007, %v1023
        %v1028 = vmul.f32 %v1008, %v1019
        %v1029 = vmul.f32 %v1009, %v1023
        %v1030 = vmul.f32 %v1010, %v1019
        %v1031 = vmul.f32 %v1011, %v1023
        %v1032 = vmul.f32 %v1012, %v1019
        %v1033 = vmul.f32 %v1013, %v1023
        %v1034 = vpack.c.bf16 %v1028, %v1026
        %v1035 = vpack.c.bf16 %v1029, %v1027
        %v1036 = vpack.c.bf16 %v1032, %v1030
        %v1037 = vpack.c.bf16 %v1033, %v1031
        %v1042 = vunpack.c.l.b16 %v1034
        %v1043 = vunpack.c.l.b16 %v1035
        %v1044 = vunpack.c.h.b16 %v1034
        %v1045 = vunpack.c.h.b16 %v1035
        %v1046 = vunpack.c.l.b16 %v1036
        %v1047 = vunpack.c.l.b16 %v1037
        %v1048 = vunpack.c.h.b16 %v1036
        %v1049 = vunpack.c.h.b16 %v1037
        %v1050 = vpack.c.b16 %v1043, %v1042
        %v1051 = vpack.c.b16 %v1045, %v1044
        %v1052 = vpack.c.b16 %v1047, %v1046
        %v1053 = vpack.c.b16 %v1049, %v1048
        %1058 = vst [vmem:[#allocation4] sm:$0xff] %v1050
        %1059 = vst [vmem:[#allocation4 + $0x8] sm:$0xff] %v1051
        %1060 = vst [vmem:[#allocation4 + $0x10] sm:$0xff] %v1052
        %1061 = vst [vmem:[#allocation4 + $0x18] sm:$0xff] %v1053
        %v1062 = vshra.s32 %v990, 4
        %v1063 = vshra.s32 %v991, 4
        %v1064 = vshra.s32 %v992, 4
        %v1065 = vshra.s32 %v993, 4
        %v1066 = vshra.s32 %v994, 4
        %v1067 = vshra.s32 %v995, 4
        %v1068 = vshra.s32 %v996, 4
        %v1069 = vshra.s32 %v997, 4
        %v1070 = vand.u32 %v1062, 15
        %v1071 = vand.u32 %v1063, 15
        %v1072 = vand.u32 %v1064, 15
        %v1073 = vand.u32 %v1065, 15
        %v1074 = vand.u32 %v1066, 15
        %v1075 = vand.u32 %v1067, 15
        %v1076 = vand.u32 %v1068, 15
        %v1077 = vand.u32 %v1069, 15
        %v1078 = vcvt.s32.f32 %v1070
        %v1079 = vcvt.s32.f32 %v1071
        %v1080 = vcvt.s32.f32 %v1072
        %v1081 = vcvt.s32.f32 %v1073
        %v1082 = vcvt.s32.f32 %v1074
        %v1083 = vcvt.s32.f32 %v1075
        %v1084 = vcvt.s32.f32 %v1076
        %v1085 = vcvt.s32.f32 %v1077
        %s1086 = scalar_lea.vmem %s369, 2 [#allocation10]
        %v1087 = vld [vmem:[%s1086] ss:$8 sm:$0x3]
        %v1089 = vlaneseq
        %v1090 = vshrl.u32 %v1089, 7
        %v1091 = vsub.s32 0, %v1090
        %v1092 = vrot.slane %v1087, %v1091
        %v1093 = vlaneseq
        %v1094 = vshrl.u32 %v1093, 7
        %v1095 = vsub.s32 1, %v1094
        %v1096 = vrot.slane %v1087, %v1095
        %v1099 = vmul.f32 %v1078, %v1092
        %v1100 = vmul.f32 %v1079, %v1096
        %v1101 = vmul.f32 %v1080, %v1092
        %v1102 = vmul.f32 %v1081, %v1096
        %v1103 = vmul.f32 %v1082, %v1092
        %v1104 = vmul.f32 %v1083, %v1096
        %v1105 = vmul.f32 %v1084, %v1092
        %v1106 = vmul.f32 %v1085, %v1096
        %v1107 = vpack.c.bf16 %v1101, %v1099
        %v1108 = vpack.c.bf16 %v1102, %v1100
        %v1109 = vpack.c.bf16 %v1105, %v1103
        %v1110 = vpack.c.bf16 %v1106, %v1104
        %v1115 = vunpack.c.l.b16 %v1107
        %v1116 = vunpack.c.l.b16 %v1108
        %v1117 = vunpack.c.h.b16 %v1107
        %v1118 = vunpack.c.h.b16 %v1108
        %v1119 = vunpack.c.l.b16 %v1109
        %v1120 = vunpack.c.l.b16 %v1110
        %v1121 = vunpack.c.h.b16 %v1109
        %v1122 = vunpack.c.h.b16 %v1110
        %v1123 = vpack.c.b16 %v1116, %v1115
        %v1124 = vpack.c.b16 %v1118, %v1117
        %v1125 = vpack.c.b16 %v1120, %v1119
        %v1126 = vpack.c.b16 %v1122, %v1121
        %1131 = vst [vmem:[#allocation4 + $0x40] sm:$0xff] %v1123
        %1132 = vst [vmem:[#allocation4 + $0x48] sm:$0xff] %v1124
        %1133 = vst [vmem:[#allocation4 + $0x50] sm:$0xff] %v1125
        %1134 = vst [vmem:[#allocation4 + $0x58] sm:$0xff] %v1126
        %v1135 = vshra.s32 %v990, 8
        %v1136 = vshra.s32 %v991, 8
        %v1137 = vshra.s32 %v992, 8
        %v1138 = vshra.s32 %v993, 8
        %v1139 = vshra.s32 %v994, 8
        %v1140 = vshra.s32 %v995, 8
        %v1141 = vshra.s32 %v996, 8
        %v1142 = vshra.s32 %v997, 8
        %v1143 = vand.u32 %v1135, 15
        %v1144 = vand.u32 %v1136, 15
        %v1145 = vand.u32 %v1137, 15
        %v1146 = vand.u32 %v1138, 15
        %v1147 = vand.u32 %v1139, 15
        %v1148 = vand.u32 %v1140, 15
        %v1149 = vand.u32 %v1141, 15
        %v1150 = vand.u32 %v1142, 15
        %v1151 = vcvt.s32.f32 %v1143
        %v1152 = vcvt.s32.f32 %v1144
        %v1153 = vcvt.s32.f32 %v1145
        %v1154 = vcvt.s32.f32 %v1146
        %v1155 = vcvt.s32.f32 %v1147
        %v1156 = vcvt.s32.f32 %v1148
        %v1157 = vcvt.s32.f32 %v1149
        %v1158 = vcvt.s32.f32 %v1150
        %s1159 = scalar_lea.vmem %s369, 4 [#allocation10]
        %v1160 = vld [vmem:[%s1159] ss:$8 sm:$0x3]
        %v1162 = vlaneseq
        %v1163 = vshrl.u32 %v1162, 7
        %v1164 = vsub.s32 0, %v1163
        %v1165 = vrot.slane %v1160, %v1164
        %v1166 = vlaneseq
        %v1167 = vshrl.u32 %v1166, 7
        %v1168 = vsub.s32 1, %v1167
        %v1169 = vrot.slane %v1160, %v1168
        %v1172 = vmul.f32 %v1151, %v1165
        %v1173 = vmul.f32 %v1152, %v1169
        %v1174 = vmul.f32 %v1153, %v1165
        %v1175 = vmul.f32 %v1154, %v1169
        %v1176 = vmul.f32 %v1155, %v1165
        %v1177 = vmul.f32 %v1156, %v1169
        %v1178 = vmul.f32 %v1157, %v1165
        %v1179 = vmul.f32 %v1158, %v1169
        %v1180 = vpack.c.bf16 %v1174, %v1172
        %v1181 = vpack.c.bf16 %v1175, %v1173
        %v1182 = vpack.c.bf16 %v1178, %v1176
        %v1183 = vpack.c.bf16 %v1179, %v1177
        %v1188 = vunpack.c.l.b16 %v1180
        %v1189 = vunpack.c.l.b16 %v1181
        %v1190 = vunpack.c.h.b16 %v1180
        %v1191 = vunpack.c.h.b16 %v1181
        %v1192 = vunpack.c.l.b16 %v1182
        %v1193 = vunpack.c.l.b16 %v1183
        %v1194 = vunpack.c.h.b16 %v1182
        %v1195 = vunpack.c.h.b16 %v1183
        %v1196 = vpack.c.b16 %v1189, %v1188
        %v1197 = vpack.c.b16 %v1191, %v1190
        %v1198 = vpack.c.b16 %v1193, %v1192
        %v1199 = vpack.c.b16 %v1195, %v1194
        %1204 = vst [vmem:[#allocation4 + $0x80] sm:$0xff] %v1196
        %1205 = vst [vmem:[#allocation4 + $0x88] sm:$0xff] %v1197
        %1206 = vst [vmem:[#allocation4 + $0x90] sm:$0xff] %v1198
        %1207 = vst [vmem:[#allocation4 + $0x98] sm:$0xff] %v1199
        %v1208 = vshra.s32 %v990, 12
        %v1209 = vshra.s32 %v991, 12
        %v1210 = vshra.s32 %v992, 12
        %v1211 = vshra.s32 %v993, 12
        %v1212 = vshra.s32 %v994, 12
        %v1213 = vshra.s32 %v995, 12
        %v1214 = vshra.s32 %v996, 12
        %v1215 = vshra.s32 %v997, 12
        %v1216 = vand.u32 %v1208, 15
        %v1217 = vand.u32 %v1209, 15
        %v1218 = vand.u32 %v1210, 15
        %v1219 = vand.u32 %v1211, 15
        %v1220 = vand.u32 %v1212, 15
        %v1221 = vand.u32 %v1213, 15
        %v1222 = vand.u32 %v1214, 15
        %v1223 = vand.u32 %v1215, 15
        %v1224 = vcvt.s32.f32 %v1216
        %v1225 = vcvt.s32.f32 %v1217
        %v1226 = vcvt.s32.f32 %v1218
        %v1227 = vcvt.s32.f32 %v1219
        %v1228 = vcvt.s32.f32 %v1220
        %v1229 = vcvt.s32.f32 %v1221
        %v1230 = vcvt.s32.f32 %v1222
        %v1231 = vcvt.s32.f32 %v1223
        %s1232 = scalar_lea.vmem %s369, 6 [#allocation10]
        %v1233 = vld [vmem:[%s1232] ss:$8 sm:$0x3]
        %v1235 = vlaneseq
        %v1236 = vshrl.u32 %v1235, 7
        %v1237 = vsub.s32 0, %v1236
        %v1238 = vrot.slane %v1233, %v1237
        %v1239 = vlaneseq
        %v1240 = vshrl.u32 %v1239, 7
        %v1241 = vsub.s32 1, %v1240
        %v1242 = vrot.slane %v1233, %v1241
        %v1245 = vmul.f32 %v1224, %v1238
        %v1246 = vmul.f32 %v1225, %v1242
        %v1247 = vmul.f32 %v1226, %v1238
        %v1248 = vmul.f32 %v1227, %v1242
        %v1249 = vmul.f32 %v1228, %v1238
        %v1250 = vmul.f32 %v1229, %v1242
        %v1251 = vmul.f32 %v1230, %v1238
        %v1252 = vmul.f32 %v1231, %v1242
        %v1253 = vpack.c.bf16 %v1247, %v1245
        %v1254 = vpack.c.bf16 %v1248, %v1246
        %v1255 = vpack.c.bf16 %v1251, %v1249
        %v1256 = vpack.c.bf16 %v1252, %v1250
        %v1261 = vunpack.c.l.b16 %v1253
        %v1262 = vunpack.c.l.b16 %v1254
        %v1263 = vunpack.c.h.b16 %v1253
        %v1264 = vunpack.c.h.b16 %v1254
        %v1265 = vunpack.c.l.b16 %v1255
        %v1266 = vunpack.c.l.b16 %v1256
        %v1267 = vunpack.c.h.b16 %v1255
        %v1268 = vunpack.c.h.b16 %v1256
        %v1269 = vpack.c.b16 %v1262, %v1261
        %v1270 = vpack.c.b16 %v1264, %v1263
        %v1271 = vpack.c.b16 %v1266, %v1265
        %v1272 = vpack.c.b16 %v1268, %v1267
        %1277 = vst [vmem:[#allocation4 + $0xc0] sm:$0xff] %v1269
        %1278 = vst [vmem:[#allocation4 + $0xc8] sm:$0xff] %v1270
        %1279 = vst [vmem:[#allocation4 + $0xd0] sm:$0xff] %v1271
        %1280 = vst [vmem:[#allocation4 + $0xd8] sm:$0xff] %v1272
        %v1281 = vshra.s32 %v990, 16
        %v1282 = vshra.s32 %v991, 16
        %v1283 = vshra.s32 %v992, 16
        %v1284 = vshra.s32 %v993, 16
        %v1285 = vshra.s32 %v994, 16
        %v1286 = vshra.s32 %v995, 16
        %v1287 = vshra.s32 %v996, 16
        %v1288 = vshra.s32 %v997, 16
        %v1289 = vand.u32 %v1281, 15
        %v1290 = vand.u32 %v1282, 15
        %v1291 = vand.u32 %v1283, 15
        %v1292 = vand.u32 %v1284, 15
        %v1293 = vand.u32 %v1285, 15
        %v1294 = vand.u32 %v1286, 15
        %v1295 = vand.u32 %v1287, 15
        %v1296 = vand.u32 %v1288, 15
        %v1297 = vcvt.s32.f32 %v1289
        %v1298 = vcvt.s32.f32 %v1290
        %v1299 = vcvt.s32.f32 %v1291
        %v1300 = vcvt.s32.f32 %v1292
        %v1301 = vcvt.s32.f32 %v1293
        %v1302 = vcvt.s32.f32 %v1294
        %v1303 = vcvt.s32.f32 %v1295
        %v1304 = vcvt.s32.f32 %v1296
        %s1305 = scalar_lea.vmem %s369, 16 [#allocation10]
        %v1306 = vld [vmem:[%s1305] ss:$8 sm:$0x3]
        %v1308 = vlaneseq
        %v1309 = vshrl.u32 %v1308, 7
        %v1310 = vsub.s32 0, %v1309
        %v1311 = vrot.slane %v1306, %v1310
        %v1312 = vlaneseq
        %v1313 = vshrl.u32 %v1312, 7
        %v1314 = vsub.s32 1, %v1313
        %v1315 = vrot.slane %v1306, %v1314
        %v1318 = vmul.f32 %v1297, %v1311
        %v1319 = vmul.f32 %v1298, %v1315
        %v1320 = vmul.f32 %v1299, %v1311
        %v1321 = vmul.f32 %v1300, %v1315
        %v1322 = vmul.f32 %v1301, %v1311
        %v1323 = vmul.f32 %v1302, %v1315
        %v1324 = vmul.f32 %v1303, %v1311
        %v1325 = vmul.f32 %v1304, %v1315
        %v1326 = vpack.c.bf16 %v1320, %v1318
        %v1327 = vpack.c.bf16 %v1321, %v1319
        %v1328 = vpack.c.bf16 %v1324, %v1322
        %v1329 = vpack.c.bf16 %v1325, %v1323
        %v1334 = vunpack.c.l.b16 %v1326
        %v1335 = vunpack.c.l.b16 %v1327
        %v1336 = vunpack.c.h.b16 %v1326
        %v1337 = vunpack.c.h.b16 %v1327
        %v1338 = vunpack.c.l.b16 %v1328
        %v1339 = vunpack.c.l.b16 %v1329
        %v1340 = vunpack.c.h.b16 %v1328
        %v1341 = vunpack.c.h.b16 %v1329
        %v1342 = vpack.c.b16 %v1335, %v1334
        %v1343 = vpack.c.b16 %v1337, %v1336
        %v1344 = vpack.c.b16 %v1339, %v1338
        %v1345 = vpack.c.b16 %v1341, %v1340
        %1350 = vst [vmem:[#allocation4 + $0x100] sm:$0xff] %v1342
        %1351 = vst [vmem:[#allocation4 + $0x108] sm:$0xff] %v1343
        %1352 = vst [vmem:[#allocation4 + $0x110] sm:$0xff] %v1344
        %1353 = vst [vmem:[#allocation4 + $0x118] sm:$0xff] %v1345
        %v1354 = vshra.s32 %v990, 20
        %v1355 = vshra.s32 %v991, 20
        %v1356 = vshra.s32 %v992, 20
        %v1357 = vshra.s32 %v993, 20
        %v1358 = vshra.s32 %v994, 20
        %v1359 = vshra.s32 %v995, 20
        %v1360 = vshra.s32 %v996, 20
        %v1361 = vshra.s32 %v997, 20
        %v1362 = vand.u32 %v1354, 15
        %v1363 = vand.u32 %v1355, 15
        %v1364 = vand.u32 %v1356, 15
        %v1365 = vand.u32 %v1357, 15
        %v1366 = vand.u32 %v1358, 15
        %v1367 = vand.u32 %v1359, 15
        %v1368 = vand.u32 %v1360, 15
        %v1369 = vand.u32 %v1361, 15
        %v1370 = vcvt.s32.f32 %v1362
        %v1371 = vcvt.s32.f32 %v1363
        %v1372 = vcvt.s32.f32 %v1364
        %v1373 = vcvt.s32.f32 %v1365
        %v1374 = vcvt.s32.f32 %v1366
        %v1375 = vcvt.s32.f32 %v1367
        %v1376 = vcvt.s32.f32 %v1368
        %v1377 = vcvt.s32.f32 %v1369
        %s1378 = scalar_lea.vmem %s369, 18 [#allocation10]
        %v1379 = vld [vmem:[%s1378] ss:$8 sm:$0x3]
        %v1381 = vlaneseq
        %v1382 = vshrl.u32 %v1381, 7
        %v1383 = vsub.s32 0, %v1382
        %v1384 = vrot.slane %v1379, %v1383
        %v1385 = vlaneseq
        %v1386 = vshrl.u32 %v1385, 7
        %v1387 = vsub.s32 1, %v1386
        %v1388 = vrot.slane %v1379, %v1387
        %v1391 = vmul.f32 %v1370, %v1384
        %v1392 = vmul.f32 %v1371, %v1388
        %v1393 = vmul.f32 %v1372, %v1384
        %v1394 = vmul.f32 %v1373, %v1388
        %v1395 = vmul.f32 %v1374, %v1384
        %v1396 = vmul.f32 %v1375, %v1388
        %v1397 = vmul.f32 %v1376, %v1384
        %v1398 = vmul.f32 %v1377, %v1388
        %v1399 = vpack.c.bf16 %v1393, %v1391
        %v1400 = vpack.c.bf16 %v1394, %v1392
        %v1401 = vpack.c.bf16 %v1397, %v1395
        %v1402 = vpack.c.bf16 %v1398, %v1396
        %v1407 = vunpack.c.l.b16 %v1399
        %v1408 = vunpack.c.l.b16 %v1400
        %v1409 = vunpack.c.h.b16 %v1399
        %v1410 = vunpack.c.h.b16 %v1400
        %v1411 = vunpack.c.l.b16 %v1401
        %v1412 = vunpack.c.l.b16 %v1402
        %v1413 = vunpack.c.h.b16 %v1401
        %v1414 = vunpack.c.h.b16 %v1402
        %v1415 = vpack.c.b16 %v1408, %v1407
        %v1416 = vpack.c.b16 %v1410, %v1409
        %v1417 = vpack.c.b16 %v1412, %v1411
        %v1418 = vpack.c.b16 %v1414, %v1413
        %1423 = vst [vmem:[#allocation4 + $0x140] sm:$0xff] %v1415
        %1424 = vst [vmem:[#allocation4 + $0x148] sm:$0xff] %v1416
        %1425 = vst [vmem:[#allocation4 + $0x150] sm:$0xff] %v1417
        %1426 = vst [vmem:[#allocation4 + $0x158] sm:$0xff] %v1418
        %v1427 = vshra.s32 %v990, 24
        %v1428 = vshra.s32 %v991, 24
        %v1429 = vshra.s32 %v992, 24
        %v1430 = vshra.s32 %v993, 24
        %v1431 = vshra.s32 %v994, 24
        %v1432 = vshra.s32 %v995, 24
        %v1433 = vshra.s32 %v996, 24
        %v1434 = vshra.s32 %v997, 24
        %v1435 = vand.u32 %v1427, 15
        %v1436 = vand.u32 %v1428, 15
        %v1437 = vand.u32 %v1429, 15
        %v1438 = vand.u32 %v1430, 15
        %v1439 = vand.u32 %v1431, 15
        %v1440 = vand.u32 %v1432, 15
        %v1441 = vand.u32 %v1433, 15
        %v1442 = vand.u32 %v1434, 15
        %v1443 = vcvt.s32.f32 %v1435
        %v1444 = vcvt.s32.f32 %v1436
        %v1445 = vcvt.s32.f32 %v1437
        %v1446 = vcvt.s32.f32 %v1438
        %v1447 = vcvt.s32.f32 %v1439
        %v1448 = vcvt.s32.f32 %v1440
        %v1449 = vcvt.s32.f32 %v1441
        %v1450 = vcvt.s32.f32 %v1442
        %s1451 = scalar_lea.vmem %s369, 20 [#allocation10]
        %v1452 = vld [vmem:[%s1451] ss:$8 sm:$0x3]
        %v1454 = vlaneseq
        %v1455 = vshrl.u32 %v1454, 7
        %v1456 = vsub.s32 0, %v1455
        %v1457 = vrot.slane %v1452, %v1456
        %v1458 = vlaneseq
        %v1459 = vshrl.u32 %v1458, 7
        %v1460 = vsub.s32 1, %v1459
        %v1461 = vrot.slane %v1452, %v1460
        %v1464 = vmul.f32 %v1443, %v1457
        %v1465 = vmul.f32 %v1444, %v1461
        %v1466 = vmul.f32 %v1445, %v1457
        %v1467 = vmul.f32 %v1446, %v1461
        %v1468 = vmul.f32 %v1447, %v1457
        %v1469 = vmul.f32 %v1448, %v1461
        %v1470 = vmul.f32 %v1449, %v1457
        %v1471 = vmul.f32 %v1450, %v1461
        %v1472 = vpack.c.bf16 %v1466, %v1464
        %v1473 = vpack.c.bf16 %v1467, %v1465
        %v1474 = vpack.c.bf16 %v1470, %v1468
        %v1475 = vpack.c.bf16 %v1471, %v1469
        %v1480 = vunpack.c.l.b16 %v1472
        %v1481 = vunpack.c.l.b16 %v1473
        %v1482 = vunpack.c.h.b16 %v1472
        %v1483 = vunpack.c.h.b16 %v1473
        %v1484 = vunpack.c.l.b16 %v1474
        %v1485 = vunpack.c.l.b16 %v1475
        %v1486 = vunpack.c.h.b16 %v1474
        %v1487 = vunpack.c.h.b16 %v1475
        %v1488 = vpack.c.b16 %v1481, %v1480
        %v1489 = vpack.c.b16 %v1483, %v1482
        %v1490 = vpack.c.b16 %v1485, %v1484
        %v1491 = vpack.c.b16 %v1487, %v1486
        %1496 = vst [vmem:[#allocation4 + $0x180] sm:$0xff] %v1488
        %1497 = vst [vmem:[#allocation4 + $0x188] sm:$0xff] %v1489
        %1498 = vst [vmem:[#allocation4 + $0x190] sm:$0xff] %v1490
        %1499 = vst [vmem:[#allocation4 + $0x198] sm:$0xff] %v1491
        %v1500 = vshra.s32 %v990, 28
        %v1501 = vshra.s32 %v991, 28
        %v1502 = vshra.s32 %v992, 28
        %v1503 = vshra.s32 %v993, 28
        %v1504 = vshra.s32 %v994, 28
        %v1505 = vshra.s32 %v995, 28
        %v1506 = vshra.s32 %v996, 28
        %v1507 = vshra.s32 %v997, 28
        %v1508 = vand.u32 %v1500, 15
        %v1509 = vand.u32 %v1501, 15
        %v1510 = vand.u32 %v1502, 15
        %v1511 = vand.u32 %v1503, 15
        %v1512 = vand.u32 %v1504, 15
        %v1513 = vand.u32 %v1505, 15
        %v1514 = vand.u32 %v1506, 15
        %v1515 = vand.u32 %v1507, 15
        %v1516 = vcvt.s32.f32 %v1508
        %v1517 = vcvt.s32.f32 %v1509
        %v1518 = vcvt.s32.f32 %v1510
        %v1519 = vcvt.s32.f32 %v1511
        %v1520 = vcvt.s32.f32 %v1512
        %v1521 = vcvt.s32.f32 %v1513
        %v1522 = vcvt.s32.f32 %v1514
        %v1523 = vcvt.s32.f32 %v1515
        %s1524 = scalar_lea.vmem %s369, 22 [#allocation10]
        %v1525 = vld [vmem:[%s1524] ss:$8 sm:$0x3]
        %v1527 = vlaneseq
        %v1528 = vshrl.u32 %v1527, 7
        %v1529 = vsub.s32 0, %v1528
        %v1530 = vrot.slane %v1525, %v1529
        %v1531 = vlaneseq
        %v1532 = vshrl.u32 %v1531, 7
        %v1533 = vsub.s32 1, %v1532
        %v1534 = vrot.slane %v1525, %v1533
        %v1537 = vmul.f32 %v1516, %v1530
        %v1538 = vmul.f32 %v1517, %v1534
        %v1539 = vmul.f32 %v1518, %v1530
        %v1540 = vmul.f32 %v1519, %v1534
        %v1541 = vmul.f32 %v1520, %v1530
        %v1542 = vmul.f32 %v1521, %v1534
        %v1543 = vmul.f32 %v1522, %v1530
        %v1544 = vmul.f32 %v1523, %v1534
        %v1545 = vpack.c.bf16 %v1539, %v1537
        %v1546 = vpack.c.bf16 %v1540, %v1538
        %v1547 = vpack.c.bf16 %v1543, %v1541
        %v1548 = vpack.c.bf16 %v1544, %v1542
        %v1553 = vunpack.c.l.b16 %v1545
        %v1554 = vunpack.c.l.b16 %v1546
        %v1555 = vunpack.c.h.b16 %v1545
        %v1556 = vunpack.c.h.b16 %v1546
        %v1557 = vunpack.c.l.b16 %v1547
        %v1558 = vunpack.c.l.b16 %v1548
        %v1559 = vunpack.c.h.b16 %v1547
        %v1560 = vunpack.c.h.b16 %v1548
        %v1561 = vpack.c.b16 %v1554, %v1553
        %v1562 = vpack.c.b16 %v1556, %v1555
        %v1563 = vpack.c.b16 %v1558, %v1557
        %v1564 = vpack.c.b16 %v1560, %v1559
        %1569 = vst [vmem:[#allocation4 + $0x1c0] sm:$0xff] %v1561
        %1570 = vst [vmem:[#allocation4 + $0x1c8] sm:$0xff] %v1562
        %1571 = vst [vmem:[#allocation4 + $0x1d0] sm:$0xff] %v1563
        %1572 = vst [vmem:[#allocation4 + $0x1d8] sm:$0xff] %v1564
        %v1573 = vld [vmem:[%s360 + $0x40] sm:$0xff]
        %v1574 = vld [vmem:[%s360 + $0x48] sm:$0xff]
        %v1575 = vld [vmem:[%s360 + $0x50] sm:$0xff]
        %v1576 = vld [vmem:[%s360 + $0x58] sm:$0xff]
        %v1577 = vld [vmem:[%s360 + $0x60] sm:$0xff]
        %v1578 = vld [vmem:[%s360 + $0x68] sm:$0xff]
        %v1579 = vld [vmem:[%s360 + $0x70] sm:$0xff]
        %v1580 = vld [vmem:[%s360 + $0x78] sm:$0xff]
        %v1581 = vand.u32 %v1573, 15
        %v1582 = vand.u32 %v1574, 15
        %v1583 = vand.u32 %v1575, 15
        %v1584 = vand.u32 %v1576, 15
        %v1585 = vand.u32 %v1577, 15
        %v1586 = vand.u32 %v1578, 15
        %v1587 = vand.u32 %v1579, 15
        %v1588 = vand.u32 %v1580, 15
        %v1589 = vcvt.s32.f32 %v1581
        %v1590 = vcvt.s32.f32 %v1582
        %v1591 = vcvt.s32.f32 %v1583
        %v1592 = vcvt.s32.f32 %v1584
        %v1593 = vcvt.s32.f32 %v1585
        %v1594 = vcvt.s32.f32 %v1586
        %v1595 = vcvt.s32.f32 %v1587
        %v1596 = vcvt.s32.f32 %v1588
        %s1597 = scalar_lea.vmem %s369, 1 [#allocation10]
        %v1598 = vld [vmem:[%s1597] ss:$8 sm:$0x3]
        %v1600 = vlaneseq
        %v1601 = vshrl.u32 %v1600, 7
        %v1602 = vsub.s32 0, %v1601
        %v1603 = vrot.slane %v1598, %v1602
        %v1604 = vlaneseq
        %v1605 = vshrl.u32 %v1604, 7
        %v1606 = vsub.s32 1, %v1605
        %v1607 = vrot.slane %v1598, %v1606
        %v1610 = vmul.f32 %v1589, %v1603
        %v1611 = vmul.f32 %v1590, %v1607
        %v1612 = vmul.f32 %v1591, %v1603
        %v1613 = vmul.f32 %v1592, %v1607
        %v1614 = vmul.f32 %v1593, %v1603
        %v1615 = vmul.f32 %v1594, %v1607
        %v1616 = vmul.f32 %v1595, %v1603
        %v1617 = vmul.f32 %v1596, %v1607
        %v1618 = vpack.c.bf16 %v1612, %v1610
        %v1619 = vpack.c.bf16 %v1613, %v1611
        %v1620 = vpack.c.bf16 %v1616, %v1614
        %v1621 = vpack.c.bf16 %v1617, %v1615
        %v1626 = vunpack.c.l.b16 %v1618
        %v1627 = vunpack.c.l.b16 %v1619
        %v1628 = vunpack.c.h.b16 %v1618
        %v1629 = vunpack.c.h.b16 %v1619
        %v1630 = vunpack.c.l.b16 %v1620
        %v1631 = vunpack.c.l.b16 %v1621
        %v1632 = vunpack.c.h.b16 %v1620
        %v1633 = vunpack.c.h.b16 %v1621
        %v1634 = vpack.c.b16 %v1627, %v1626
        %v1635 = vpack.c.b16 %v1629, %v1628
        %v1636 = vpack.c.b16 %v1631, %v1630
        %v1637 = vpack.c.b16 %v1633, %v1632
        %1642 = vst [vmem:[#allocation4 + $0x20] sm:$0xff] %v1634
        %1643 = vst [vmem:[#allocation4 + $0x28] sm:$0xff] %v1635
        %1644 = vst [vmem:[#allocation4 + $0x30] sm:$0xff] %v1636
        %1645 = vst [vmem:[#allocation4 + $0x38] sm:$0xff] %v1637
        %v1646 = vshra.s32 %v1573, 4
        %v1647 = vshra.s32 %v1574, 4
        %v1648 = vshra.s32 %v1575, 4
        %v1649 = vshra.s32 %v1576, 4
        %v1650 = vshra.s32 %v1577, 4
        %v1651 = vshra.s32 %v1578, 4
        %v1652 = vshra.s32 %v1579, 4
        %v1653 = vshra.s32 %v1580, 4
        %v1654 = vand.u32 %v1646, 15
        %v1655 = vand.u32 %v1647, 15
        %v1656 = vand.u32 %v1648, 15
        %v1657 = vand.u32 %v1649, 15
        %v1658 = vand.u32 %v1650, 15
        %v1659 = vand.u32 %v1651, 15
        %v1660 = vand.u32 %v1652, 15
        %v1661 = vand.u32 %v1653, 15
        %v1662 = vcvt.s32.f32 %v1654
        %v1663 = vcvt.s32.f32 %v1655
        %v1664 = vcvt.s32.f32 %v1656
        %v1665 = vcvt.s32.f32 %v1657
        %v1666 = vcvt.s32.f32 %v1658
        %v1667 = vcvt.s32.f32 %v1659
        %v1668 = vcvt.s32.f32 %v1660
        %v1669 = vcvt.s32.f32 %v1661
        %s1670 = scalar_lea.vmem %s369, 3 [#allocation10]
        %v1671 = vld [vmem:[%s1670] ss:$8 sm:$0x3]
        %v1673 = vlaneseq
        %v1674 = vshrl.u32 %v1673, 7
        %v1675 = vsub.s32 0, %v1674
        %v1676 = vrot.slane %v1671, %v1675
        %v1677 = vlaneseq
        %v1678 = vshrl.u32 %v1677, 7
        %v1679 = vsub.s32 1, %v1678
        %v1680 = vrot.slane %v1671, %v1679
        %v1683 = vmul.f32 %v1662, %v1676
        %v1684 = vmul.f32 %v1663, %v1680
        %v1685 = vmul.f32 %v1664, %v1676
        %v1686 = vmul.f32 %v1665, %v1680
        %v1687 = vmul.f32 %v1666, %v1676
        %v1688 = vmul.f32 %v1667, %v1680
        %v1689 = vmul.f32 %v1668, %v1676
        %v1690 = vmul.f32 %v1669, %v1680
        %v1691 = vpack.c.bf16 %v1685, %v1683
        %v1692 = vpack.c.bf16 %v1686, %v1684
        %v1693 = vpack.c.bf16 %v1689, %v1687
        %v1694 = vpack.c.bf16 %v1690, %v1688
        %v1699 = vunpack.c.l.b16 %v1691
        %v1700 = vunpack.c.l.b16 %v1692
        %v1701 = vunpack.c.h.b16 %v1691
        %v1702 = vunpack.c.h.b16 %v1692
        %v1703 = vunpack.c.l.b16 %v1693
        %v1704 = vunpack.c.l.b16 %v1694
        %v1705 = vunpack.c.h.b16 %v1693
        %v1706 = vunpack.c.h.b16 %v1694
        %v1707 = vpack.c.b16 %v1700, %v1699
        %v1708 = vpack.c.b16 %v1702, %v1701
        %v1709 = vpack.c.b16 %v1704, %v1703
        %v1710 = vpack.c.b16 %v1706, %v1705
        %1715 = vst [vmem:[#allocation4 + $0x60] sm:$0xff] %v1707
        %1716 = vst [vmem:[#allocation4 + $0x68] sm:$0xff] %v1708
        %1717 = vst [vmem:[#allocation4 + $0x70] sm:$0xff] %v1709
        %1718 = vst [vmem:[#allocation4 + $0x78] sm:$0xff] %v1710
        %v1719 = vshra.s32 %v1573, 8
        %v1720 = vshra.s32 %v1574, 8
        %v1721 = vshra.s32 %v1575, 8
        %v1722 = vshra.s32 %v1576, 8
        %v1723 = vshra.s32 %v1577, 8
        %v1724 = vshra.s32 %v1578, 8
        %v1725 = vshra.s32 %v1579, 8
        %v1726 = vshra.s32 %v1580, 8
        %v1727 = vand.u32 %v1719, 15
        %v1728 = vand.u32 %v1720, 15
        %v1729 = vand.u32 %v1721, 15
        %v1730 = vand.u32 %v1722, 15
        %v1731 = vand.u32 %v1723, 15
        %v1732 = vand.u32 %v1724, 15
        %v1733 = vand.u32 %v1725, 15
        %v1734 = vand.u32 %v1726, 15
        %v1735 = vcvt.s32.f32 %v1727
        %v1736 = vcvt.s32.f32 %v1728
        %v1737 = vcvt.s32.f32 %v1729
        %v1738 = vcvt.s32.f32 %v1730
        %v1739 = vcvt.s32.f32 %v1731
        %v1740 = vcvt.s32.f32 %v1732
        %v1741 = vcvt.s32.f32 %v1733
        %v1742 = vcvt.s32.f32 %v1734
        %s1743 = scalar_lea.vmem %s369, 5 [#allocation10]
        %v1744 = vld [vmem:[%s1743] ss:$8 sm:$0x3]
        %v1746 = vlaneseq
        %v1747 = vshrl.u32 %v1746, 7
        %v1748 = vsub.s32 0, %v1747
        %v1749 = vrot.slane %v1744, %v1748
        %v1750 = vlaneseq
        %v1751 = vshrl.u32 %v1750, 7
        %v1752 = vsub.s32 1, %v1751
        %v1753 = vrot.slane %v1744, %v1752
        %v1756 = vmul.f32 %v1735, %v1749
        %v1757 = vmul.f32 %v1736, %v1753
        %v1758 = vmul.f32 %v1737, %v1749
        %v1759 = vmul.f32 %v1738, %v1753
        %v1760 = vmul.f32 %v1739, %v1749
        %v1761 = vmul.f32 %v1740, %v1753
        %v1762 = vmul.f32 %v1741, %v1749
        %v1763 = vmul.f32 %v1742, %v1753
        %v1764 = vpack.c.bf16 %v1758, %v1756
        %v1765 = vpack.c.bf16 %v1759, %v1757
        %v1766 = vpack.c.bf16 %v1762, %v1760
        %v1767 = vpack.c.bf16 %v1763, %v1761
        %v1772 = vunpack.c.l.b16 %v1764
        %v1773 = vunpack.c.l.b16 %v1765
        %v1774 = vunpack.c.h.b16 %v1764
        %v1775 = vunpack.c.h.b16 %v1765
        %v1776 = vunpack.c.l.b16 %v1766
        %v1777 = vunpack.c.l.b16 %v1767
        %v1778 = vunpack.c.h.b16 %v1766
        %v1779 = vunpack.c.h.b16 %v1767
        %v1780 = vpack.c.b16 %v1773, %v1772
        %v1781 = vpack.c.b16 %v1775, %v1774
        %v1782 = vpack.c.b16 %v1777, %v1776
        %v1783 = vpack.c.b16 %v1779, %v1778
        %1788 = vst [vmem:[#allocation4 + $0xa0] sm:$0xff] %v1780
        %1789 = vst [vmem:[#allocation4 + $0xa8] sm:$0xff] %v1781
        %1790 = vst [vmem:[#allocation4 + $0xb0] sm:$0xff] %v1782
        %1791 = vst [vmem:[#allocation4 + $0xb8] sm:$0xff] %v1783
        %v1792 = vshra.s32 %v1573, 12
        %v1793 = vshra.s32 %v1574, 12
        %v1794 = vshra.s32 %v1575, 12
        %v1795 = vshra.s32 %v1576, 12
        %v1796 = vshra.s32 %v1577, 12
        %v1797 = vshra.s32 %v1578, 12
        %v1798 = vshra.s32 %v1579, 12
        %v1799 = vshra.s32 %v1580, 12
        %v1800 = vand.u32 %v1792, 15
        %v1801 = vand.u32 %v1793, 15
        %v1802 = vand.u32 %v1794, 15
        %v1803 = vand.u32 %v1795, 15
        %v1804 = vand.u32 %v1796, 15
        %v1805 = vand.u32 %v1797, 15
        %v1806 = vand.u32 %v1798, 15
        %v1807 = vand.u32 %v1799, 15
        %v1808 = vcvt.s32.f32 %v1800
        %v1809 = vcvt.s32.f32 %v1801
        %v1810 = vcvt.s32.f32 %v1802
        %v1811 = vcvt.s32.f32 %v1803
        %v1812 = vcvt.s32.f32 %v1804
        %v1813 = vcvt.s32.f32 %v1805
        %v1814 = vcvt.s32.f32 %v1806
        %v1815 = vcvt.s32.f32 %v1807
        %s1816 = scalar_lea.vmem %s369, 7 [#allocation10]
        %v1817 = vld [vmem:[%s1816] ss:$8 sm:$0x3]
        %v1819 = vlaneseq
        %v1820 = vshrl.u32 %v1819, 7
        %v1821 = vsub.s32 0, %v1820
        %v1822 = vrot.slane %v1817, %v1821
        %v1823 = vlaneseq
        %v1824 = vshrl.u32 %v1823, 7
        %v1825 = vsub.s32 1, %v1824
        %v1826 = vrot.slane %v1817, %v1825
        %v1829 = vmul.f32 %v1808, %v1822
        %v1830 = vmul.f32 %v1809, %v1826
        %v1831 = vmul.f32 %v1810, %v1822
        %v1832 = vmul.f32 %v1811, %v1826
        %v1833 = vmul.f32 %v1812, %v1822
        %v1834 = vmul.f32 %v1813, %v1826
        %v1835 = vmul.f32 %v1814, %v1822
        %v1836 = vmul.f32 %v1815, %v1826
        %v1837 = vpack.c.bf16 %v1831, %v1829
        %v1838 = vpack.c.bf16 %v1832, %v1830
        %v1839 = vpack.c.bf16 %v1835, %v1833
        %v1840 = vpack.c.bf16 %v1836, %v1834
        %v1845 = vunpack.c.l.b16 %v1837
        %v1846 = vunpack.c.l.b16 %v1838
        %v1847 = vunpack.c.h.b16 %v1837
        %v1848 = vunpack.c.h.b16 %v1838
        %v1849 = vunpack.c.l.b16 %v1839
        %v1850 = vunpack.c.l.b16 %v1840
        %v1851 = vunpack.c.h.b16 %v1839
        %v1852 = vunpack.c.h.b16 %v1840
        %v1853 = vpack.c.b16 %v1846, %v1845
        %v1854 = vpack.c.b16 %v1848, %v1847
        %v1855 = vpack.c.b16 %v1850, %v1849
        %v1856 = vpack.c.b16 %v1852, %v1851
        %1861 = vst [vmem:[#allocation4 + $0xe0] sm:$0xff] %v1853
        %1862 = vst [vmem:[#allocation4 + $0xe8] sm:$0xff] %v1854
        %1863 = vst [vmem:[#allocation4 + $0xf0] sm:$0xff] %v1855
        %1864 = vst [vmem:[#allocation4 + $0xf8] sm:$0xff] %v1856
        %v1865 = vshra.s32 %v1573, 16
        %v1866 = vshra.s32 %v1574, 16
        %v1867 = vshra.s32 %v1575, 16
        %v1868 = vshra.s32 %v1576, 16
        %v1869 = vshra.s32 %v1577, 16
        %v1870 = vshra.s32 %v1578, 16
        %v1871 = vshra.s32 %v1579, 16
        %v1872 = vshra.s32 %v1580, 16
        %v1873 = vand.u32 %v1865, 15
        %v1874 = vand.u32 %v1866, 15
        %v1875 = vand.u32 %v1867, 15
        %v1876 = vand.u32 %v1868, 15
        %v1877 = vand.u32 %v1869, 15
        %v1878 = vand.u32 %v1870, 15
        %v1879 = vand.u32 %v1871, 15
        %v1880 = vand.u32 %v1872, 15
        %v1881 = vcvt.s32.f32 %v1873
        %v1882 = vcvt.s32.f32 %v1874
        %v1883 = vcvt.s32.f32 %v1875
        %v1884 = vcvt.s32.f32 %v1876
        %v1885 = vcvt.s32.f32 %v1877
        %v1886 = vcvt.s32.f32 %v1878
        %v1887 = vcvt.s32.f32 %v1879
        %v1888 = vcvt.s32.f32 %v1880
        %s1889 = scalar_lea.vmem %s369, 17 [#allocation10]
        %v1890 = vld [vmem:[%s1889] ss:$8 sm:$0x3]
        %v1892 = vlaneseq
        %v1893 = vshrl.u32 %v1892, 7
        %v1894 = vsub.s32 0, %v1893
        %v1895 = vrot.slane %v1890, %v1894
        %v1896 = vlaneseq
        %v1897 = vshrl.u32 %v1896, 7
        %v1898 = vsub.s32 1, %v1897
        %v1899 = vrot.slane %v1890, %v1898
        %v1902 = vmul.f32 %v1881, %v1895
        %v1903 = vmul.f32 %v1882, %v1899
        %v1904 = vmul.f32 %v1883, %v1895
        %v1905 = vmul.f32 %v1884, %v1899
        %v1906 = vmul.f32 %v1885, %v1895
        %v1907 = vmul.f32 %v1886, %v1899
        %v1908 = vmul.f32 %v1887, %v1895
        %v1909 = vmul.f32 %v1888, %v1899
        %v1910 = vpack.c.bf16 %v1904, %v1902
        %v1911 = vpack.c.bf16 %v1905, %v1903
        %v1912 = vpack.c.bf16 %v1908, %v1906
        %v1913 = vpack.c.bf16 %v1909, %v1907
        %v1918 = vunpack.c.l.b16 %v1910
        %v1919 = vunpack.c.l.b16 %v1911
        %v1920 = vunpack.c.h.b16 %v1910
        %v1921 = vunpack.c.h.b16 %v1911
        %v1922 = vunpack.c.l.b16 %v1912
        %v1923 = vunpack.c.l.b16 %v1913
        %v1924 = vunpack.c.h.b16 %v1912
        %v1925 = vunpack.c.h.b16 %v1913
        %v1926 = vpack.c.b16 %v1919, %v1918
        %v1927 = vpack.c.b16 %v1921, %v1920
        %v1928 = vpack.c.b16 %v1923, %v1922
        %v1929 = vpack.c.b16 %v1925, %v1924
        %1934 = vst [vmem:[#allocation4 + $0x120] sm:$0xff] %v1926
        %1935 = vst [vmem:[#allocation4 + $0x128] sm:$0xff] %v1927
        %1936 = vst [vmem:[#allocation4 + $0x130] sm:$0xff] %v1928
        %1937 = vst [vmem:[#allocation4 + $0x138] sm:$0xff] %v1929
        %v1938 = vshra.s32 %v1573, 20
        %v1939 = vshra.s32 %v1574, 20
        %v1940 = vshra.s32 %v1575, 20
        %v1941 = vshra.s32 %v1576, 20
        %v1942 = vshra.s32 %v1577, 20
        %v1943 = vshra.s32 %v1578, 20
        %v1944 = vshra.s32 %v1579, 20
        %v1945 = vshra.s32 %v1580, 20
        %v1946 = vand.u32 %v1938, 15
        %v1947 = vand.u32 %v1939, 15
        %v1948 = vand.u32 %v1940, 15
        %v1949 = vand.u32 %v1941, 15
        %v1950 = vand.u32 %v1942, 15
        %v1951 = vand.u32 %v1943, 15
        %v1952 = vand.u32 %v1944, 15
        %v1953 = vand.u32 %v1945, 15
        %v1954 = vcvt.s32.f32 %v1946
        %v1955 = vcvt.s32.f32 %v1947
        %v1956 = vcvt.s32.f32 %v1948
        %v1957 = vcvt.s32.f32 %v1949
        %v1958 = vcvt.s32.f32 %v1950
        %v1959 = vcvt.s32.f32 %v1951
        %v1960 = vcvt.s32.f32 %v1952
        %v1961 = vcvt.s32.f32 %v1953
        %s1962 = scalar_lea.vmem %s369, 19 [#allocation10]
        %v1963 = vld [vmem:[%s1962] ss:$8 sm:$0x3]
        %v1965 = vlaneseq
        %v1966 = vshrl.u32 %v1965, 7
        %v1967 = vsub.s32 0, %v1966
        %v1968 = vrot.slane %v1963, %v1967
        %v1969 = vlaneseq
        %v1970 = vshrl.u32 %v1969, 7
        %v1971 = vsub.s32 1, %v1970
        %v1972 = vrot.slane %v1963, %v1971
        %v1975 = vmul.f32 %v1954, %v1968
        %v1976 = vmul.f32 %v1955, %v1972
        %v1977 = vmul.f32 %v1956, %v1968
        %v1978 = vmul.f32 %v1957, %v1972
        %v1979 = vmul.f32 %v1958, %v1968
        %v1980 = vmul.f32 %v1959, %v1972
        %v1981 = vmul.f32 %v1960, %v1968
        %v1982 = vmul.f32 %v1961, %v1972
        %v1983 = vpack.c.bf16 %v1977, %v1975
        %v1984 = vpack.c.bf16 %v1978, %v1976
        %v1985 = vpack.c.bf16 %v1981, %v1979
        %v1986 = vpack.c.bf16 %v1982, %v1980
        %v1991 = vunpack.c.l.b16 %v1983
        %v1992 = vunpack.c.l.b16 %v1984
        %v1993 = vunpack.c.h.b16 %v1983
        %v1994 = vunpack.c.h.b16 %v1984
        %v1995 = vunpack.c.l.b16 %v1985
        %v1996 = vunpack.c.l.b16 %v1986
        %v1997 = vunpack.c.h.b16 %v1985
        %v1998 = vunpack.c.h.b16 %v1986
        %v1999 = vpack.c.b16 %v1992, %v1991
        %v2000 = vpack.c.b16 %v1994, %v1993
        %v2001 = vpack.c.b16 %v1996, %v1995
        %v2002 = vpack.c.b16 %v1998, %v1997
        %2007 = vst [vmem:[#allocation4 + $0x160] sm:$0xff] %v1999
        %2008 = vst [vmem:[#allocation4 + $0x168] sm:$0xff] %v2000
        %2009 = vst [vmem:[#allocation4 + $0x170] sm:$0xff] %v2001
        %2010 = vst [vmem:[#allocation4 + $0x178] sm:$0xff] %v2002
        %v2011 = vshra.s32 %v1573, 24
        %v2012 = vshra.s32 %v1574, 24
        %v2013 = vshra.s32 %v1575, 24
        %v2014 = vshra.s32 %v1576, 24
        %v2015 = vshra.s32 %v1577, 24
        %v2016 = vshra.s32 %v1578, 24
        %v2017 = vshra.s32 %v1579, 24
        %v2018 = vshra.s32 %v1580, 24
        %v2019 = vand.u32 %v2011, 15
        %v2020 = vand.u32 %v2012, 15
        %v2021 = vand.u32 %v2013, 15
        %v2022 = vand.u32 %v2014, 15
        %v2023 = vand.u32 %v2015, 15
        %v2024 = vand.u32 %v2016, 15
        %v2025 = vand.u32 %v2017, 15
        %v2026 = vand.u32 %v2018, 15
        %v2027 = vcvt.s32.f32 %v2019
        %v2028 = vcvt.s32.f32 %v2020
        %v2029 = vcvt.s32.f32 %v2021
        %v2030 = vcvt.s32.f32 %v2022
        %v2031 = vcvt.s32.f32 %v2023
        %v2032 = vcvt.s32.f32 %v2024
        %v2033 = vcvt.s32.f32 %v2025
        %v2034 = vcvt.s32.f32 %v2026
        %s2035 = scalar_lea.vmem %s369, 21 [#allocation10]
        %v2036 = vld [vmem:[%s2035] ss:$8 sm:$0x3]
        %v2038 = vlaneseq
        %v2039 = vshrl.u32 %v2038, 7
        %v2040 = vsub.s32 0, %v2039
        %v2041 = vrot.slane %v2036, %v2040
        %v2042 = vlaneseq
        %v2043 = vshrl.u32 %v2042, 7
        %v2044 = vsub.s32 1, %v2043
        %v2045 = vrot.slane %v2036, %v2044
        %v2048 = vmul.f32 %v2027, %v2041
        %v2049 = vmul.f32 %v2028, %v2045
        %v2050 = vmul.f32 %v2029, %v2041
        %v2051 = vmul.f32 %v2030, %v2045
        %v2052 = vmul.f32 %v2031, %v2041
        %v2053 = vmul.f32 %v2032, %v2045
        %v2054 = vmul.f32 %v2033, %v2041
        %v2055 = vmul.f32 %v2034, %v2045
        %v2056 = vpack.c.bf16 %v2050, %v2048
        %v2057 = vpack.c.bf16 %v2051, %v2049
        %v2058 = vpack.c.bf16 %v2054, %v2052
        %v2059 = vpack.c.bf16 %v2055, %v2053
        %v2064 = vunpack.c.l.b16 %v2056
        %v2065 = vunpack.c.l.b16 %v2057
        %v2066 = vunpack.c.h.b16 %v2056
        %v2067 = vunpack.c.h.b16 %v2057
        %v2068 = vunpack.c.l.b16 %v2058
        %v2069 = vunpack.c.l.b16 %v2059
        %v2070 = vunpack.c.h.b16 %v2058
        %v2071 = vunpack.c.h.b16 %v2059
        %v2072 = vpack.c.b16 %v2065, %v2064
        %v2073 = vpack.c.b16 %v2067, %v2066
        %v2074 = vpack.c.b16 %v2069, %v2068
        %v2075 = vpack.c.b16 %v2071, %v2070
        %2080 = vst [vmem:[#allocation4 + $0x1a0] sm:$0xff] %v2072
        %2081 = vst [vmem:[#allocation4 + $0x1a8] sm:$0xff] %v2073
        %2082 = vst [vmem:[#allocation4 + $0x1b0] sm:$0xff] %v2074
        %2083 = vst [vmem:[#allocation4 + $0x1b8] sm:$0xff] %v2075
        %v2084 = vshra.s32 %v1573, 28
        %v2085 = vshra.s32 %v1574, 28
        %v2086 = vshra.s32 %v1575, 28
        %v2087 = vshra.s32 %v1576, 28
        %v2088 = vshra.s32 %v1577, 28
        %v2089 = vshra.s32 %v1578, 28
        %v2090 = vshra.s32 %v1579, 28
        %v2091 = vshra.s32 %v1580, 28
        %v2092 = vand.u32 %v2084, 15
        %v2093 = vand.u32 %v2085, 15
        %v2094 = vand.u32 %v2086, 15
        %v2095 = vand.u32 %v2087, 15
        %v2096 = vand.u32 %v2088, 15
        %v2097 = vand.u32 %v2089, 15
        %v2098 = vand.u32 %v2090, 15
        %v2099 = vand.u32 %v2091, 15
        %v2100 = vcvt.s32.f32 %v2092
        %v2101 = vcvt.s32.f32 %v2093
        %v2102 = vcvt.s32.f32 %v2094
        %v2103 = vcvt.s32.f32 %v2095
        %v2104 = vcvt.s32.f32 %v2096
        %v2105 = vcvt.s32.f32 %v2097
        %v2106 = vcvt.s32.f32 %v2098
        %v2107 = vcvt.s32.f32 %v2099
        %s2108 = scalar_lea.vmem %s369, 23 [#allocation10]
        %v2109 = vld [vmem:[%s2108] ss:$8 sm:$0x3]
        %v2111 = vlaneseq
        %v2112 = vshrl.u32 %v2111, 7
        %v2113 = vsub.s32 0, %v2112
        %v2114 = vrot.slane %v2109, %v2113
        %v2115 = vlaneseq
        %v2116 = vshrl.u32 %v2115, 7
        %v2117 = vsub.s32 1, %v2116
        %v2118 = vrot.slane %v2109, %v2117
        %v2121 = vmul.f32 %v2100, %v2114
        %v2122 = vmul.f32 %v2101, %v2118
        %v2123 = vmul.f32 %v2102, %v2114
        %v2124 = vmul.f32 %v2103, %v2118
        %v2125 = vmul.f32 %v2104, %v2114
        %v2126 = vmul.f32 %v2105, %v2118
        %v2127 = vmul.f32 %v2106, %v2114
        %v2128 = vmul.f32 %v2107, %v2118
        %v2129 = vpack.c.bf16 %v2123, %v2121
        %v2130 = vpack.c.bf16 %v2124, %v2122
        %v2131 = vpack.c.bf16 %v2127, %v2125
        %v2132 = vpack.c.bf16 %v2128, %v2126
        %v2137 = vunpack.c.l.b16 %v2129
        %v2138 = vunpack.c.l.b16 %v2130
        %v2139 = vunpack.c.h.b16 %v2129
        %v2140 = vunpack.c.h.b16 %v2130
        %v2141 = vunpack.c.l.b16 %v2131
        %v2142 = vunpack.c.l.b16 %v2132
        %v2143 = vunpack.c.h.b16 %v2131
        %v2144 = vunpack.c.h.b16 %v2132
        %v2145 = vpack.c.b16 %v2138, %v2137
        %v2146 = vpack.c.b16 %v2140, %v2139
        %v2147 = vpack.c.b16 %v2142, %v2141
        %v2148 = vpack.c.b16 %v2144, %v2143
        %2153 = vst [vmem:[#allocation4 + $0x1e0] sm:$0xff] %v2145
        %2154 = vst [vmem:[#allocation4 + $0x1e8] sm:$0xff] %v2146
        %2155 = vst [vmem:[#allocation4 + $0x1f0] sm:$0xff] %v2147
        %2156 = vst [vmem:[#allocation4 + $0x1f8] sm:$0xff] %v2148
        %v2157 = vld [vmem:[#allocation2] sm:$0xff]
        %v2158 = vld [vmem:[#allocation2 + $0x8] sm:$0xff]
        %v2159 = vld [vmem:[#allocation4] sm:$0xff]
        %v2160 = vld [vmem:[#allocation4 + $0x8] sm:$0xff]
        %v2161 = vld [vmem:[#allocation4 + $0x10] sm:$0xff]
        %v2162 = vld [vmem:[#allocation4 + $0x18] sm:$0xff]
        %v2163 = vld [vmem:[#allocation4 + $0x20] sm:$0xff]
        %v2164 = vld [vmem:[#allocation4 + $0x28] sm:$0xff]
        %v2165 = vld [vmem:[#allocation4 + $0x30] sm:$0xff]
        %v2166 = vld [vmem:[#allocation4 + $0x38] sm:$0xff]
        %v2167 = vld [vmem:[#allocation4 + $0x40] sm:$0xff]
        %v2168 = vld [vmem:[#allocation4 + $0x48] sm:$0xff]
        %v2169 = vld [vmem:[#allocation4 + $0x50] sm:$0xff]
        %v2170 = vld [vmem:[#allocation4 + $0x58] sm:$0xff]
        %v2171 = vld [vmem:[#allocation4 + $0x60] sm:$0xff]
        %v2172 = vld [vmem:[#allocation4 + $0x68] sm:$0xff]
        %v2173 = vld [vmem:[#allocation4 + $0x70] sm:$0xff]
        %v2174 = vld [vmem:[#allocation4 + $0x78] sm:$0xff]
        %v2175 = vld [vmem:[#allocation4 + $0x80] sm:$0xff]
        %v2176 = vld [vmem:[#allocation4 + $0x88] sm:$0xff]
        %v2177 = vld [vmem:[#allocation4 + $0x90] sm:$0xff]
        %v2178 = vld [vmem:[#allocation4 + $0x98] sm:$0xff]
        %v2179 = vld [vmem:[#allocation4 + $0xa0] sm:$0xff]
        %v2180 = vld [vmem:[#allocation4 + $0xa8] sm:$0xff]
        %v2181 = vld [vmem:[#allocation4 + $0xb0] sm:$0xff]
        %v2182 = vld [vmem:[#allocation4 + $0xb8] sm:$0xff]
        %v2183 = vld [vmem:[#allocation4 + $0xc0] sm:$0xff]
        %v2184 = vld [vmem:[#allocation4 + $0xc8] sm:$0xff]
        %v2185 = vld [vmem:[#allocation4 + $0xd0] sm:$0xff]
        %v2186 = vld [vmem:[#allocation4 + $0xd8] sm:$0xff]
        %v2187 = vld [vmem:[#allocation4 + $0xe0] sm:$0xff]
        %v2188 = vld [vmem:[#allocation4 + $0xe8] sm:$0xff]
        %v2189 = vld [vmem:[#allocation4 + $0xf0] sm:$0xff]
        %v2190 = vld [vmem:[#allocation4 + $0xf8] sm:$0xff]
        %v2191 = vld [vmem:[#allocation4 + $0x100] sm:$0xff]
        %v2192 = vld [vmem:[#allocation4 + $0x108] sm:$0xff]
        %v2193 = vld [vmem:[#allocation4 + $0x110] sm:$0xff]
        %v2194 = vld [vmem:[#allocation4 + $0x118] sm:$0xff]
        %v2195 = vld [vmem:[#allocation4 + $0x120] sm:$0xff]
        %v2196 = vld [vmem:[#allocation4 + $0x128] sm:$0xff]
        %v2197 = vld [vmem:[#allocation4 + $0x130] sm:$0xff]
        %v2198 = vld [vmem:[#allocation4 + $0x138] sm:$0xff]
        %v2199 = vld [vmem:[#allocation4 + $0x140] sm:$0xff]
        %v2200 = vld [vmem:[#allocation4 + $0x148] sm:$0xff]
        %v2201 = vld [vmem:[#allocation4 + $0x150] sm:$0xff]
        %v2202 = vld [vmem:[#allocation4 + $0x158] sm:$0xff]
        %v2203 = vld [vmem:[#allocation4 + $0x160] sm:$0xff]
        %v2204 = vld [vmem:[#allocation4 + $0x168] sm:$0xff]
        %v2205 = vld [vmem:[#allocation4 + $0x170] sm:$0xff]
        %v2206 = vld [vmem:[#allocation4 + $0x178] sm:$0xff]
        %v2207 = vld [vmem:[#allocation4 + $0x180] sm:$0xff]
        %v2208 = vld [vmem:[#allocation4 + $0x188] sm:$0xff]
        %v2209 = vld [vmem:[#allocation4 + $0x190] sm:$0xff]
        %v2210 = vld [vmem:[#allocation4 + $0x198] sm:$0xff]
        %v2211 = vld [vmem:[#allocation4 + $0x1a0] sm:$0xff]
        %v2212 = vld [vmem:[#allocation4 + $0x1a8] sm:$0xff]
        %v2213 = vld [vmem:[#allocation4 + $0x1b0] sm:$0xff]
        %v2214 = vld [vmem:[#allocation4 + $0x1b8] sm:$0xff]
        %v2215 = vld [vmem:[#allocation4 + $0x1c0] sm:$0xff]
        %v2216 = vld [vmem:[#allocation4 + $0x1c8] sm:$0xff]
        %v2217 = vld [vmem:[#allocation4 + $0x1d0] sm:$0xff]
        %v2218 = vld [vmem:[#allocation4 + $0x1d8] sm:$0xff]
        %v2219 = vld [vmem:[#allocation4 + $0x1e0] sm:$0xff]
        %v2220 = vld [vmem:[#allocation4 + $0x1e8] sm:$0xff]
        %v2221 = vld [vmem:[#allocation4 + $0x1f0] sm:$0xff]
        %v2222 = vld [vmem:[#allocation4 + $0x1f8] sm:$0xff]
        %v2225 = vunpack.c.l.b16 %v2157
        %v2226 = vunpack.c.h.b16 %v2157
        %v2227 = vunpack.c.l.b16 %v2158
        %v2228 = vunpack.c.h.b16 %v2158
        %v2229 = vpack.c.b16 %v2225, %v2225
        %v2230 = vpack.c.b16 %v2226, %v2226
        %v2231 = vpack.c.b16 %v2227, %v2227
        %v2232 = vpack.c.b16 %v2228, %v2228
        %v2301 = vunpack.c.l.b16 %v2159
        %v2302 = vunpack.c.h.b16 %v2159
        %v2303 = vunpack.c.l.b16 %v2160
        %v2304 = vunpack.c.h.b16 %v2160
        %v2305 = vunpack.c.l.b16 %v2161
        %v2306 = vunpack.c.h.b16 %v2161
        %v2307 = vunpack.c.l.b16 %v2162
        %v2308 = vunpack.c.h.b16 %v2162
        %v2309 = vunpack.c.l.b16 %v2163
        %v2310 = vunpack.c.h.b16 %v2163
        %v2311 = vunpack.c.l.b16 %v2164
        %v2312 = vunpack.c.h.b16 %v2164
        %v2313 = vunpack.c.l.b16 %v2165
        %v2314 = vunpack.c.h.b16 %v2165
        %v2315 = vunpack.c.l.b16 %v2166
        %v2316 = vunpack.c.h.b16 %v2166
        %v2317 = vunpack.c.l.b16 %v2167
        %v2318 = vunpack.c.h.b16 %v2167
        %v2319 = vunpack.c.l.b16 %v2168
        %v2320 = vunpack.c.h.b16 %v2168
        %v2321 = vunpack.c.l.b16 %v2169
        %v2322 = vunpack.c.h.b16 %v2169
        %v2323 = vunpack.c.l.b16 %v2170
        %v2324 = vunpack.c.h.b16 %v2170
        %v2325 = vunpack.c.l.b16 %v2171
        %v2326 = vunpack.c.h.b16 %v2171
        %v2327 = vunpack.c.l.b16 %v2172
        %v2328 = vunpack.c.h.b16 %v2172
        %v2329 = vunpack.c.l.b16 %v2173
        %v2330 = vunpack.c.h.b16 %v2173
        %v2331 = vunpack.c.l.b16 %v2174
        %v2332 = vunpack.c.h.b16 %v2174
        %v2333 = vunpack.c.l.b16 %v2175
        %v2334 = vunpack.c.h.b16 %v2175
        %v2335 = vunpack.c.l.b16 %v2176
        %v2336 = vunpack.c.h.b16 %v2176
        %v2337 = vunpack.c.l.b16 %v2177
        %v2338 = vunpack.c.h.b16 %v2177
        %v2339 = vunpack.c.l.b16 %v2178
        %v2340 = vunpack.c.h.b16 %v2178
        %v2341 = vunpack.c.l.b16 %v2179
        %v2342 = vunpack.c.h.b16 %v2179
        %v2343 = vunpack.c.l.b16 %v2180
        %v2344 = vunpack.c.h.b16 %v2180
        %v2345 = vunpack.c.l.b16 %v2181
        %v2346 = vunpack.c.h.b16 %v2181
        %v2347 = vunpack.c.l.b16 %v2182
        %v2348 = vunpack.c.h.b16 %v2182
        %v2349 = vunpack.c.l.b16 %v2183
        %v2350 = vunpack.c.h.b16 %v2183
        %v2351 = vunpack.c.l.b16 %v2184
        %v2352 = vunpack.c.h.b16 %v2184
        %v2353 = vunpack.c.l.b16 %v2185
        %v2354 = vunpack.c.h.b16 %v2185
        %v2355 = vunpack.c.l.b16 %v2186
        %v2356 = vunpack.c.h.b16 %v2186
        %v2357 = vunpack.c.l.b16 %v2187
        %v2358 = vunpack.c.h.b16 %v2187
        %v2359 = vunpack.c.l.b16 %v2188
        %v2360 = vunpack.c.h.b16 %v2188
        %v2361 = vunpack.c.l.b16 %v2189
        %v2362 = vunpack.c.h.b16 %v2189
        %v2363 = vunpack.c.l.b16 %v2190
        %v2364 = vunpack.c.h.b16 %v2190
        %v2365 = vunpack.c.l.b16 %v2191
        %v2366 = vunpack.c.h.b16 %v2191
        %v2367 = vunpack.c.l.b16 %v2192
        %v2368 = vunpack.c.h.b16 %v2192
        %v2369 = vunpack.c.l.b16 %v2193
        %v2370 = vunpack.c.h.b16 %v2193
        %v2371 = vunpack.c.l.b16 %v2194
        %v2372 = vunpack.c.h.b16 %v2194
        %v2373 = vunpack.c.l.b16 %v2195
        %v2374 = vunpack.c.h.b16 %v2195
        %v2375 = vunpack.c.l.b16 %v2196
        %v2376 = vunpack.c.h.b16 %v2196
        %v2377 = vunpack.c.l.b16 %v2197
        %v2378 = vunpack.c.h.b16 %v2197
        %v2379 = vunpack.c.l.b16 %v2198
        %v2380 = vunpack.c.h.b16 %v2198
        %v2381 = vunpack.c.l.b16 %v2199
        %v2382 = vunpack.c.h.b16 %v2199
        %v2383 = vunpack.c.l.b16 %v2200
        %v2384 = vunpack.c.h.b16 %v2200
        %v2385 = vunpack.c.l.b16 %v2201
        %v2386 = vunpack.c.h.b16 %v2201
        %v2387 = vunpack.c.l.b16 %v2202
        %v2388 = vunpack.c.h.b16 %v2202
        %v2389 = vunpack.c.l.b16 %v2203
        %v2390 = vunpack.c.h.b16 %v2203
        %v2391 = vunpack.c.l.b16 %v2204
        %v2392 = vunpack.c.h.b16 %v2204
        %v2393 = vunpack.c.l.b16 %v2205
        %v2394 = vunpack.c.h.b16 %v2205
        %v2395 = vunpack.c.l.b16 %v2206
        %v2396 = vunpack.c.h.b16 %v2206
        %v2397 = vunpack.c.l.b16 %v2207
        %v2398 = vunpack.c.h.b16 %v2207
        %v2399 = vunpack.c.l.b16 %v2208
        %v2400 = vunpack.c.h.b16 %v2208
        %v2401 = vunpack.c.l.b16 %v2209
        %v2402 = vunpack.c.h.b16 %v2209
        %v2403 = vunpack.c.l.b16 %v2210
        %v2404 = vunpack.c.h.b16 %v2210
        %v2405 = vunpack.c.l.b16 %v2211
        %v2406 = vunpack.c.h.b16 %v2211
        %v2407 = vunpack.c.l.b16 %v2212
        %v2408 = vunpack.c.h.b16 %v2212
        %v2409 = vunpack.c.l.b16 %v2213
        %v2410 = vunpack.c.h.b16 %v2213
        %v2411 = vunpack.c.l.b16 %v2214
        %v2412 = vunpack.c.h.b16 %v2214
        %v2413 = vunpack.c.l.b16 %v2215
        %v2414 = vunpack.c.h.b16 %v2215
        %v2415 = vunpack.c.l.b16 %v2216
        %v2416 = vunpack.c.h.b16 %v2216
        %v2417 = vunpack.c.l.b16 %v2217
        %v2418 = vunpack.c.h.b16 %v2217
        %v2419 = vunpack.c.l.b16 %v2218
        %v2420 = vunpack.c.h.b16 %v2218
        %v2421 = vunpack.c.l.b16 %v2219
        %v2422 = vunpack.c.h.b16 %v2219
        %v2423 = vunpack.c.l.b16 %v2220
        %v2424 = vunpack.c.h.b16 %v2220
        %v2425 = vunpack.c.l.b16 %v2221
        %v2426 = vunpack.c.h.b16 %v2221
        %v2427 = vunpack.c.l.b16 %v2222
        %v2428 = vunpack.c.h.b16 %v2222
        %v2429 = vpack.c.b16 %v2303, %v2301
        %v2430 = vpack.c.b16 %v2304, %v2302
        %v2431 = vpack.c.b16 %v2307, %v2305
        %v2432 = vpack.c.b16 %v2308, %v2306
        %v2433 = vpack.c.b16 %v2311, %v2309
        %v2434 = vpack.c.b16 %v2312, %v2310
        %v2435 = vpack.c.b16 %v2315, %v2313
        %v2436 = vpack.c.b16 %v2316, %v2314
        %v2437 = vpack.c.b16 %v2319, %v2317
        %v2438 = vpack.c.b16 %v2320, %v2318
        %v2439 = vpack.c.b16 %v2323, %v2321
        %v2440 = vpack.c.b16 %v2324, %v2322
        %v2441 = vpack.c.b16 %v2327, %v2325
        %v2442 = vpack.c.b16 %v2328, %v2326
        %v2443 = vpack.c.b16 %v2331, %v2329
        %v2444 = vpack.c.b16 %v2332, %v2330
        %v2445 = vpack.c.b16 %v2335, %v2333
        %v2446 = vpack.c.b16 %v2336, %v2334
        %v2447 = vpack.c.b16 %v2339, %v2337
        %v2448 = vpack.c.b16 %v2340, %v2338
        %v2449 = vpack.c.b16 %v2343, %v2341
        %v2450 = vpack.c.b16 %v2344, %v2342
        %v2451 = vpack.c.b16 %v2347, %v2345
        %v2452 = vpack.c.b16 %v2348, %v2346
        %v2453 = vpack.c.b16 %v2351, %v2349
        %v2454 = vpack.c.b16 %v2352, %v2350
        %v2455 = vpack.c.b16 %v2355, %v2353
        %v2456 = vpack.c.b16 %v2356, %v2354
        %v2457 = vpack.c.b16 %v2359, %v2357
        %v2458 = vpack.c.b16 %v2360, %v2358
        %v2459 = vpack.c.b16 %v2363, %v2361
        %v2460 = vpack.c.b16 %v2364, %v2362
        %v2461 = vpack.c.b16 %v2367, %v2365
        %v2462 = vpack.c.b16 %v2368, %v2366
        %v2463 = vpack.c.b16 %v2371, %v2369
        %v2464 = vpack.c.b16 %v2372, %v2370
        %v2465 = vpack.c.b16 %v2375, %v2373
        %v2466 = vpack.c.b16 %v2376, %v2374
        %v2467 = vpack.c.b16 %v2379, %v2377
        %v2468 = vpack.c.b16 %v2380, %v2378
        %v2469 = vpack.c.b16 %v2383, %v2381
        %v2470 = vpack.c.b16 %v2384, %v2382
        %v2471 = vpack.c.b16 %v2387, %v2385
        %v2472 = vpack.c.b16 %v2388, %v2386
        %v2473 = vpack.c.b16 %v2391, %v2389
        %v2474 = vpack.c.b16 %v2392, %v2390
        %v2475 = vpack.c.b16 %v2395, %v2393
        %v2476 = vpack.c.b16 %v2396, %v2394
        %v2477 = vpack.c.b16 %v2399, %v2397
        %v2478 = vpack.c.b16 %v2400, %v2398
        %v2479 = vpack.c.b16 %v2403, %v2401
        %v2480 = vpack.c.b16 %v2404, %v2402
        %v2481 = vpack.c.b16 %v2407, %v2405
        %v2482 = vpack.c.b16 %v2408, %v2406
        %v2483 = vpack.c.b16 %v2411, %v2409
        %v2484 = vpack.c.b16 %v2412, %v2410
        %v2485 = vpack.c.b16 %v2415, %v2413
        %v2486 = vpack.c.b16 %v2416, %v2414
        %v2487 = vpack.c.b16 %v2419, %v2417
        %v2488 = vpack.c.b16 %v2420, %v2418
        %v2489 = vpack.c.b16 %v2423, %v2421
        %v2490 = vpack.c.b16 %v2424, %v2422
        %v2491 = vpack.c.b16 %v2427, %v2425
        %v2492 = vpack.c.b16 %v2428, %v2426
        %2557 = vmatprep.subr.bf16.mxu0 %v2444
        %2558 = vmatpush1.bf16.msra.mxu0 %v2443
        %2559 = vmatprep.subr.bf16.mxu0 %v2442
        %2560 = vmatpush1.bf16.msra.mxu0 %v2441
        %2561 = vmatprep.subr.bf16.mxu0 %v2440
        %2562 = vmatpush1.bf16.msra.mxu0 %v2439
        %2563 = vmatprep.subr.bf16.mxu0 %v2438
        %2564 = vmatpush1.bf16.msra.mxu0 %v2437
        %2565 = vmatprep.subr.bf16.mxu0 %v2436
        %2566 = vmatpush1.bf16.msra.mxu0 %v2435
        %2567 = vmatprep.subr.bf16.mxu0 %v2434
        %2568 = vmatpush1.bf16.msra.mxu0 %v2433
        %2569 = vmatprep.subr.bf16.mxu0 %v2432
        %2570 = vmatpush1.bf16.msra.mxu0 %v2431
        %2571 = vmatprep.subr.bf16.mxu0 %v2430
        %2572 = vmatpush1.bf16.msra.mxu0 %v2429
        %2573 = vmatprep.subr.bf16.mxu0 %v2460
        %2574 = vmatpush2.bf16.msra.mxu0 %v2459
        %2575 = vmatprep.subr.bf16.mxu0 %v2458
        %2576 = vmatpush2.bf16.msra.mxu0 %v2457
        %2577 = vmatprep.subr.bf16.mxu0 %v2456
        %2578 = vmatpush2.bf16.msra.mxu0 %v2455
        %2579 = vmatprep.subr.bf16.mxu0 %v2454
        %2580 = vmatpush2.bf16.msra.mxu0 %v2453
        %2581 = vmatprep.subr.bf16.mxu0 %v2452
        %2582 = vmatpush2.bf16.msra.mxu0 %v2451
        %2583 = vmatprep.subr.bf16.mxu0 %v2450
        %2584 = vmatpush2.bf16.msra.mxu0 %v2449
        %2585 = vmatprep.subr.bf16.mxu0 %v2448
        %2586 = vmatpush2.bf16.msra.mxu0 %v2447
        %2587 = vmatprep.subr.bf16.mxu0 %v2446
        %2588 = vmatpush2.bf16.msra.mxu0 %v2445
        %2589 = vmatprep.mubr.bf16.mxu0 %v2230
        %2590 = vmatmul.mubr.bf16.gmra.mxu0 %v2229
        %v2591 = vpop.f32.mrf.mxu0
        %v2592 = vadd.f32 0.0, %v2591
        %v2593 = vpop.f32.mrf.mxu0
        %v2594 = vadd.f32 0.0, %v2593
        %v2595 = vpop.f32.mrf.mxu0
        %v2596 = vpop.f32.mrf.mxu0
        %2597 = vdwg.mxu0
        %2598 = vmatprep.subr.bf16.mxu0 %v2476
        %2599 = vmatpush1.bf16.msra.mxu0 %v2475
        %2600 = vmatprep.subr.bf16.mxu0 %v2474
        %2601 = vmatpush1.bf16.msra.mxu0 %v2473
        %2602 = vmatprep.subr.bf16.mxu0 %v2472
        %2603 = vmatpush1.bf16.msra.mxu0 %v2471
        %2604 = vmatprep.subr.bf16.mxu0 %v2470
        %2605 = vmatpush1.bf16.msra.mxu0 %v2469
        %2606 = vmatprep.subr.bf16.mxu0 %v2468
        %2607 = vmatpush1.bf16.msra.mxu0 %v2467
        %2608 = vmatprep.subr.bf16.mxu0 %v2466
        %2609 = vmatpush1.bf16.msra.mxu0 %v2465
        %2610 = vmatprep.subr.bf16.mxu0 %v2464
        %2611 = vmatpush1.bf16.msra.mxu0 %v2463
        %2612 = vmatprep.subr.bf16.mxu0 %v2462
        %2613 = vmatpush1.bf16.msra.mxu0 %v2461
        %2614 = vmatprep.subr.bf16.mxu0 %v2492
        %2615 = vmatpush2.bf16.msra.mxu0 %v2491
        %2616 = vmatprep.subr.bf16.mxu0 %v2490
        %2617 = vmatpush2.bf16.msra.mxu0 %v2489
        %2618 = vmatprep.subr.bf16.mxu0 %v2488
        %2619 = vmatpush2.bf16.msra.mxu0 %v2487
        %2620 = vmatprep.subr.bf16.mxu0 %v2486
        %2621 = vmatpush2.bf16.msra.mxu0 %v2485
        %2622 = vmatprep.subr.bf16.mxu0 %v2484
        %2623 = vmatpush2.bf16.msra.mxu0 %v2483
        %2624 = vmatprep.subr.bf16.mxu0 %v2482
        %2625 = vmatpush2.bf16.msra.mxu0 %v2481
        %2626 = vmatprep.subr.bf16.mxu0 %v2480
        %2627 = vmatpush2.bf16.msra.mxu0 %v2479
        %2628 = vmatprep.subr.bf16.mxu0 %v2478
        %2629 = vmatpush2.bf16.msra.mxu0 %v2477
        %2630 = vmatprep.mubr.bf16.mxu0 %v2232
        %2631 = vmatmul.mubr.bf16.gmra.mxu0 %v2231
        %v2632 = vpop.f32.mrf.mxu0
        %v2633 = vadd.f32 %v2592, %v2632
        %v2634 = vpop.f32.mrf.mxu0
        %v2635 = vadd.f32 %v2594, %v2634
        %v2636 = vpop.f32.mrf.mxu0
        %v2637 = vpop.f32.mrf.mxu0
        %2638 = vdwg.mxu0
        %v2639 = vld [vmem:[#allocation3] sm:$0xff]
        %v2640 = vld [vmem:[%s378] sm:$0xff]
        %v2641 = vld [vmem:[%s378 + $0x8] sm:$0xff]
        %v2642 = vld [vmem:[%s378 + $0x10] sm:$0xff]
        %v2643 = vld [vmem:[%s378 + $0x18] sm:$0xff]
        %vm2644 = vcmask 130048
        %v2646 = vsel %vm2644, %v2639, 0
        %2648 = vmatprep.subr.mxu0 0.0
        %2649 = vmatpush1.msra.mxu0 0.0
        %2650 = vmatprep.subr.mxu0 0.0
        %2651 = vmatpush1.msra.mxu0 0.0
        %2652 = vmatprep.subr.mxu0 0.0
        %2653 = vmatpush1.msra.mxu0 0.0
        %2654 = vmatprep.subr.mxu0 0.0
        %2655 = vmatpush1.msra.mxu0 0.0
        %2656 = vmatprep.subr.mxu0 0.0
        %2657 = vmatpush1.msra.mxu0 0.0
        %2658 = vmatprep.subr.mxu0 0.0
        %2659 = vmatpush1.msra.mxu0 0.0
        %2660 = vmatprep.subr.mxu0 0.0
        %2661 = vmatpush1.msra.mxu0 0.0
        %2662 = vmatprep.subr.mxu0 0.0
        %2663 = vmatpush1.msra.mxu0 0.0
        %2664 = vmatprep.subr.mxu0 0.0
        %2665 = vmatpush1.msra.mxu0 0.0
        %2666 = vmatprep.subr.mxu0 0.0
        %2667 = vmatpush1.msra.mxu0 0.0
        %2668 = vmatprep.subr.mxu0 0.0
        %2669 = vmatpush1.msra.mxu0 0.0
        %2670 = vmatprep.subr.mxu0 0.0
        %2671 = vmatpush1.msra.mxu0 0.0
        %2672 = vmatprep.subr.mxu0 0.0
        %2673 = vmatpush1.msra.mxu0 0.0
        %2674 = vmatprep.subr.mxu0 0.0
        %2675 = vmatpush1.msra.mxu0 0.0
        %2676 = vmatprep.subr.mxu0 %v2643
        %2677 = vmatpush1.msra.mxu0 %v2642
        %2678 = vmatprep.subr.mxu0 %v2641
        %2679 = vmatpush1.msra.mxu0 %v2640
        %2680 = vmatprep.subr.mxu0 0.0
        %2681 = vmatpush2.msra.mxu0 0.0
        %2682 = vmatprep.subr.mxu0 0.0
        %2683 = vmatpush2.msra.mxu0 0.0
        %2684 = vmatprep.subr.mxu0 0.0
        %2685 = vmatpush2.msra.mxu0 0.0
        %2686 = vmatprep.subr.mxu0 0.0
        %2687 = vmatpush2.msra.mxu0 0.0
        %2688 = vmatprep.subr.mxu0 0.0
        %2689 = vmatpush2.msra.mxu0 0.0
        %2690 = vmatprep.subr.mxu0 0.0
        %2691 = vmatpush2.msra.mxu0 0.0
        %2692 = vmatprep.subr.mxu0 0.0
        %2693 = vmatpush2.msra.mxu0 0.0
        %2694 = vmatprep.subr.mxu0 0.0
        %2695 = vmatpush2.msra.mxu0 0.0
        %2696 = vmatprep.subr.mxu0 0.0
        %2697 = vmatpush2.msra.mxu0 0.0
        %2698 = vmatprep.subr.mxu0 0.0
        %2699 = vmatpush2.msra.mxu0 0.0
        %2700 = vmatprep.subr.mxu0 0.0
        %2701 = vmatpush2.msra.mxu0 0.0
        %2702 = vmatprep.subr.mxu0 0.0
        %2703 = vmatpush2.msra.mxu0 0.0
        %2704 = vmatprep.subr.mxu0 0.0
        %2705 = vmatpush2.msra.mxu0 0.0
        %2706 = vmatprep.subr.mxu0 0.0
        %2707 = vmatpush2.msra.mxu0 0.0
        %2708 = vmatprep.subr.mxu0 0.0
        %2709 = vmatpush2.msra.mxu0 0.0
        %2710 = vmatprep.subr.mxu0 0.0
        %2711 = vmatpush2.msra.mxu0 0.0
        %2712 = vmatprep.mubr.f32.mxu0 0.0
        %2713 = vmatmul.mubr.f32.gmra.mxu0 %v2646
        %v2714 = vpop.f32.mrf.mxu0
        %v2715 = vadd.f32 0.0, %v2714
        %v2716 = vpop.f32.mrf.mxu0
        %v2717 = vadd.f32 0.0, %v2716
        %2718 = vdwg.mxu0
        %v2719 = vsub.f32 %v2633, %v2715
        %v2720 = vsub.f32 %v2635, %v2717
        %v2721 = vld [vmem:[%s441] sm:$0x3]
        %v2723 = vlaneseq
        %v2724 = vshrl.u32 %v2723, 7
        %v2725 = vsub.s32 0, %v2724
        %v2726 = vrot.slane %v2721, %v2725
        %v2727 = vlaneseq
        %v2728 = vshrl.u32 %v2727, 7
        %v2729 = vsub.s32 1, %v2728
        %v2730 = vrot.slane %v2721, %v2729
        %v2733 = vadd.f32 %v2719, %v2726
        %v2734 = vadd.f32 %v2720, %v2730
        %v2735 = vxor.u32 %v2733, 2147483648
        %v2736 = vxor.u32 %v2734, 2147483648
        %v2737 = vmul.f32 %v2735, 1.442695
        %v2738 = vpow.pop %v2737
        %v2739 = vmul.f32 %v2736, 1.442695
        %v2740 = vpow.pop %v2739
        %v2741 = vadd.f32 %v2738, 1.0
        %v2742 = vadd.f32 %v2740, 1.0
        %v2743 = vrcp.pop %v2741
        %v2744 = vmul.f32 1.0, %v2743
        %v2745 = vrcp.pop %v2742
        %v2746 = vmul.f32 1.0, %v2745
        %v2747 = vmul.f32 %v2733, %v2744
        %v2748 = vmul.f32 %v2734, %v2746
        %v2749 = vld [vmem:[%s387] sm:$0xff]
        %v2750 = vld [vmem:[%s387 + $0x8] sm:$0xff]
        %v2751 = vmul.f32 %v2747, %v2749
        %v2752 = vmul.f32 %v2748, %v2750
        %2753 = vst [vmem:[%s434] sm:$0xff] %v2751
        %2754 = vst [vmem:[%s434 + $0x8] sm:$0xff] %v2752
        %s2755 = sand.u32 %s207, 1
        %s2756 = scalar_lea.sflag [#allocation7], %s2755
        %s2757 = sand.u32 %s207, 1
        %s2758 = smul.addr %s2757, 16
        %s2759 = scalar_lea.vmem [#allocation14], %s2758
        // Predicated region
        $region69: #{tpu_custom_call.1} parent=43 // pred_check
          %p2760 = pneg %p217
        $region70: #{tpu_custom_call.1} parent=43 // pred_check_branch
          %2762 = sbr.rel (%p2760) target = $region72
        $region71: #{tpu_custom_call.1} parent=43 // pred_region
          %s2763 = smul.u32 2, %s32
          %s2765 = ssub.s32 256, 256
          %2766 = vsyncadd %s2756, %s2765
          %s2767 = smul.addr %s31, 4
          %s2768 = sadd.s32 %s2763, %s2767
          %s2769 = smul.addr %s2768, 128
          %s2770 = scalar_lea.hbm %s6, %s2769
          %s2772 = sshll.u32 %s2759, 4
          %s2773 = int_to_ptr.vmem [resolvable:$true] %s2772
          %2775 = dma.vmem_to_hbm [thread:$0]  %s2773, 256, %s2770, %s2756
        $region72: #{tpu_custom_call.1} parent=43 // pred_fallthru
          _
      $region44: #{tpu_custom_call.1} parent=5 // pred_fallthru
        _
      %p2776 = scmp.le.s32.totalorder 2, %s22
      // Predicated region
      $region73: #{tpu_custom_call.1} parent=5 // pred_check
        %p2777 = pneg %p2776
      $region74: #{tpu_custom_call.1} parent=5 // pred_check_branch
        %2779 = sbr.rel (%p2777) target = $region76
      $region75: #{tpu_custom_call.1} parent=5 // pred_region
        %s2780 = ssub.s32 %s22, 2
        // Predicated region
        $region77: #{tpu_custom_call.1} parent=75 // pred_check
          %p2781 = pneg %p223
        $region78: #{tpu_custom_call.1} parent=75 // pred_check_branch
          %2783 = sbr.rel (%p2781) target = $region80
        $region79: #{tpu_custom_call.1} parent=75 // pred_region
          %s2784 = sand.u32 %s208, 1
          %s2785 = scalar_lea.sflag [#allocation7], %s2784
          %s2786 = sand.u32 %s208, 1
          %s2787 = smul.addr %s2786, 16
          %s2788 = scalar_lea.vmem [#allocation14], %s2787
          %2789 = dma.done %s2785, 256
        $region80: #{tpu_custom_call.1} parent=75 // pred_fallthru
          _
      $region76: #{tpu_custom_call.1} parent=5 // pred_fallthru
        _
    $region6: #{tpu_custom_call.1} parent=1 // loop_footer
      %s26 = sadd.s32 1, %s22
    $region7: #{tpu_custom_call.1} parent=1 // loop_footer_branch
      %21 = sbr.rel target = $region3
    $region8: #{tpu_custom_call.1} parent=1 // loop_exit
      _
    %2790 = vsyncpa [#allocation6], 1
    %s2791 = scalar_lea.sflag [#allocation6], 1
    %2792 = vsyncpa %s2791, 1
    %2793 = vsyncpa [#allocation9], 1
    %s2794 = scalar_lea.sflag [#allocation9], 1
    %2795 = vsyncpa %s2794, 1
    %2796 = vsyncpa [#allocation12], 1
    %s2797 = scalar_lea.sflag [#allocation12], 1
    %2798 = vsyncpa %s2797, 1
    %2799 = vsyncpa [#allocation7], 1
    %s2800 = scalar_lea.sflag [#allocation7], 1
    %2801 = vsyncpa %s2800, 1

</llo_original>
